<compile_context>
chip_gen: v7x
topology: tpu7x:2x2x1
jax: 0.10.0
libtpu: 0.0.40
codegen_flags: <defaults>
</compile_context>

<pallas_src>
import jax
import jax.numpy as jnp
from jax.experimental import pallas as pl
from jax.experimental.pallas import tpu as pltpu


def _gelu_exact(x):
    # Matches torch.nn.GELU() default (erf formulation).
    return 0.5 * x * (1.0 + jax.lax.erf(x * (1.0 / jnp.sqrt(2.0).astype(x.dtype))))


def predictor_kernel(x_ref, pol_ref,
                     ln_g_ref, ln_b_ref,
                     w1_ref, b1_ref,
                     w2l_ref, w2g_ref, b2_ref,
                     w3_ref, b3_ref,
                     w4_ref, b4_ref,
                     out_ref):
    Bb, N, C = x_ref.shape
    half = C // 2
    M = Bb * N

    # ---- in_conv: LayerNorm (eps=1e-5, torch default) over flattened tokens ----
    x = x_ref[...].astype(jnp.float32).reshape(M, C)
    mean = jnp.mean(x, axis=-1, keepdims=True)
    var = jnp.mean(jnp.square(x - mean), axis=-1, keepdims=True)
    xln = (x - mean) * jax.lax.rsqrt(var + 1e-5) * ln_g_ref[...] + ln_b_ref[...]

    # ---- in_conv: Linear + GELU ----
    h = _gelu_exact(jnp.dot(xln, w1_ref[...],
                            preferred_element_type=jnp.float32) + b1_ref[...])   # (M, C)

    # ---- policy-weighted global pooling (batched MXU matmul) ----
    local_x = h[:, :half]                                   # (M, C/2)
    h_glob = h[:, half:].reshape(Bb, N, half)               # (Bb, N, C/2)
    pol = pol_ref[...].astype(jnp.float32)                  # (Bb, 1, N), lane-dense
    num = jnp.einsum('bkn,bnc->bkc', pol, h_glob,
                     preferred_element_type=jnp.float32)    # (Bb, 1, C/2)
    num = num.reshape(Bb, half)                             # (Bb, C/2)
    den = jnp.sum(pol, axis=-1)                             # (Bb, 1)
    # Precondition: sum(policy) > 0 per batch (same as the PyTorch module).
    global_x = num * pl.reciprocal(den)                     # (Bb, C/2)

    # ---- out_conv layer 1: local matmul + rank-1 global contribution ----
    lc = jnp.dot(local_x, w2l_ref[...],
                 preferred_element_type=jnp.float32)        # (M, C/2)
    gc = jnp.dot(global_x, w2g_ref[...],
                 preferred_element_type=jnp.float32)        # (Bb, C/2)
    h2 = _gelu_exact(lc.reshape(Bb, N, half) + gc[:, None, :] + b2_ref[...])
    h2 = h2.reshape(M, half)

    # ---- out_conv layers 2 & 3 ----
    h3 = _gelu_exact(jnp.dot(h2, w3_ref[...],
                             preferred_element_type=jnp.float32) + b3_ref[...])  # (M, C/4)
    logits = jnp.dot(h3, w4_ref[...],
                     preferred_element_type=jnp.float32) + b4_ref[...]           # (M, 2)

    # ---- log-softmax over the 2-wide last dim (explicit slices, no lane reduce) ----
    a = logits[:, 0:1]
    b = logits[:, 1:2]
    m = jnp.maximum(a, b)
    lse = m + jnp.log(jnp.exp(a - m) + jnp.exp(b - m))
    out_ref[...] = (logits - lse).reshape(Bb, N, 2).astype(out_ref.dtype)


def _choose_block_b(B, N, C, itemsize=4, vmem_budget_bytes=4 << 20):
    """Batches per grid step: big enough to amortize the ~0.35us/step overhead,
    small enough for v7x's 64 MiB VMEM, and (when possible) leaving >= 2 grid
    steps so both TensorCores get work under dimension_semantics=('parallel',)."""
    # Rough per-batch footprint: double-buffered x block + h/h2/h3 temporaries.
    per_b = N * C * itemsize * 6
    bb = max(1, min(B, vmem_budget_bytes // max(per_b, 1)))
    while bb > 1 and (B % bb != 0 or B // bb < 2):
        bb -= 1
    return bb


def predictor_lg(x, policy, params, *, block_b=None):
    B, N, C = x.shape
    half = C // 2

    # Split w2 into local/global halves (rank-1 global path in the kernel).
    w2 = params["w2"]
    weights = [
        params["ln_g"], params["ln_b"],
        params["w1"], params["b1"],
        w2[:half], w2[half:], params["b2"],
        params["w3"], params["b3"],
        params["w4"], params["b4"],
    ]

    # Lane-dense policy row: (B, N, 1) -> (B, 1, N).
    pol_t = jnp.swapaxes(policy, 1, 2)

    bb = block_b if block_b is not None else _choose_block_b(B, N, C)
    assert B % bb == 0, (B, bb)
    grid = (B // bb,)

    def _full_spec(arr):
        nd = arr.ndim
        return pl.BlockSpec(arr.shape, lambda i, _nd=nd: (0,) * _nd)

    in_specs = [
        pl.BlockSpec((bb, N, C), lambda i: (i, 0, 0)),   # x: streamed per block
        pl.BlockSpec((bb, 1, N), lambda i: (i, 0, 0)),   # policy^T: streamed
    ] + [_full_spec(w) for w in weights]                 # weights: VMEM-resident

    out_specs = pl.BlockSpec((bb, N, 2), lambda i: (i, 0, 0))

    return pl.pallas_call(
        predictor_kernel,
        out_shape=jax.ShapeDtypeStruct((B, N, 2), jnp.float32),
        grid=grid,
        in_specs=in_specs,
        out_specs=out_specs,
        compiler_params=pltpu.CompilerParams(
            dimension_semantics=("parallel",),
            vmem_limit_bytes=32 * 1024 * 1024),
    )(x, pol_t, *weights)


def predictor_ref(x, policy, p):
    """Pure-JAX reference of the PyTorch forward pass."""
    C = x.shape[-1]
    half = C // 2
    mean = jnp.mean(x, -1, keepdims=True)
    var = jnp.mean(jnp.square(x - mean), -1, keepdims=True)
    xln = (x - mean) * jax.lax.rsqrt(var + 1e-5) * p["ln_g"][0] + p["ln_b"][0]
    h = _gelu_exact(xln @ p["w1"] + p["b1"][0])
    local = h[..., :half]
    glob = (jnp.sum(h[..., half:] * policy, axis=1, keepdims=True)
            / jnp.sum(policy, axis=1, keepdims=True))
    feat = jnp.concatenate([local, jnp.broadcast_to(glob, local.shape)], -1)
    h2 = _gelu_exact(feat @ p["w2"] + p["b2"][0])
    h3 = _gelu_exact(h2 @ p["w3"] + p["b3"][0])
    logits = h3 @ p["w4"] + p["b4"][0]
    return jax.nn.log_softmax(logits, axis=-1)


if __name__ == "__main__":
    key = jax.random.PRNGKey(0)
    # embed_dim = 32 (divisible by 4), 16 tokens, batch 8 -> 2 grid steps of 4.
    B, N, C = 8, 16, 32
    keys = jax.random.split(key, 12)

    x = jax.random.normal(keys[0], (B, N, C), jnp.float32)
    policy = (jax.random.uniform(keys[1], (B, N, 1)) > 0.3).astype(jnp.float32)
    policy = policy.at[:, 0, 0].set(1.0)  # guarantee non-zero pooling denominator

    s = 0.1
    params = dict(
        ln_g=1.0 + s * jax.random.normal(keys[2], (1, C), jnp.float32),
        ln_b=s * jax.random.normal(keys[3], (1, C), jnp.float32),
        w1=s * jax.random.normal(keys[4], (C, C), jnp.float32),
        b1=s * jax.random.normal(keys[5], (1, C), jnp.float32),
        w2=s * jax.random.normal(keys[6], (C, C // 2), jnp.float32),
        b2=s * jax.random.normal(keys[7], (1, C // 2), jnp.float32),
        w3=s * jax.random.normal(keys[8], (C // 2, C // 4), jnp.float32),
        b3=s * jax.random.normal(keys[9], (1, C // 4), jnp.float32),
        w4=s * jax.random.normal(keys[10], (C // 4, 2), jnp.float32),
        b4=s * jax.random.normal(keys[11], (1, 2), jnp.float32),
    )

    out = predictor_lg(x, policy, params)
    jax.block_until_ready(out)

    ref = predictor_ref(x, policy, params)
    assert out.shape == (B, N, 2)
    # Tolerance 1e-3: the kernel's policy pooling runs on the MXU (default TPU
    # matmul precision truncates f32 operands to bf16) whereas the pure-JAX
    # reference reduces that term in exact f32 elementwise arithmetic.
    err = jnp.max(jnp.abs(out - ref))
    assert jnp.allclose(out, ref, atol=1e-3, rtol=1e-3), f"max abs err = {err}"
    print("KERNEL_OK")
</pallas_src>

<mosaic_0001>
module attributes {stable_mosaic.version = 11 : i64} {
  func.func @predictor_kernel(%arg0: i32, %arg1: memref<4x16x32xf32, #tpu.memory_space<vmem>>, %arg2: memref<4x1x16xf32, #tpu.memory_space<vmem>>, %arg3: memref<1x32xf32, #tpu.memory_space<vmem>>, %arg4: memref<1x32xf32, #tpu.memory_space<vmem>>, %arg5: memref<32x32xf32, #tpu.memory_space<vmem>>, %arg6: memref<1x32xf32, #tpu.memory_space<vmem>>, %arg7: memref<16x16xf32, #tpu.memory_space<vmem>>, %arg8: memref<16x16xf32, #tpu.memory_space<vmem>>, %arg9: memref<1x16xf32, #tpu.memory_space<vmem>>, %arg10: memref<16x8xf32, #tpu.memory_space<vmem>>, %arg11: memref<1x8xf32, #tpu.memory_space<vmem>>, %arg12: memref<8x2xf32, #tpu.memory_space<vmem>>, %arg13: memref<1x2xf32, #tpu.memory_space<vmem>>, %arg14: memref<4x16x2xf32, #tpu.memory_space<vmem>>) attributes {dimension_semantics = [#tpu.dimension_semantics<parallel>], iteration_bounds = array<i64: 2>, scalar_prefetch = 0 : i64, scratch_operands = 0 : i64, tpu.core_type = #tpu.core_type<tc>, window_params = [{transform_indices = @transform_0, window_bounds = array<i64: 4, 16, 32>}, {transform_indices = @transform_1, window_bounds = array<i64: 4, 1, 16>}, {pipeline_mode = #tpu.pipeline_mode<synchronous>, transform_indices = @transform_2, window_bounds = array<i64: 1, 32>}, {pipeline_mode = #tpu.pipeline_mode<synchronous>, transform_indices = @transform_3, window_bounds = array<i64: 1, 32>}, {pipeline_mode = #tpu.pipeline_mode<synchronous>, transform_indices = @transform_4, window_bounds = array<i64: 32, 32>}, {pipeline_mode = #tpu.pipeline_mode<synchronous>, transform_indices = @transform_5, window_bounds = array<i64: 1, 32>}, {pipeline_mode = #tpu.pipeline_mode<synchronous>, transform_indices = @transform_6, window_bounds = array<i64: 16, 16>}, {pipeline_mode = #tpu.pipeline_mode<synchronous>, transform_indices = @transform_7, window_bounds = array<i64: 16, 16>}, {pipeline_mode = #tpu.pipeline_mode<synchronous>, transform_indices = @transform_8, window_bounds = array<i64: 1, 16>}, {pipeline_mode = #tpu.pipeline_mode<synchronous>, transform_indices = @transform_9, window_bounds = array<i64: 16, 8>}, {pipeline_mode = #tpu.pipeline_mode<synchronous>, transform_indices = @transform_10, window_bounds = array<i64: 1, 8>}, {pipeline_mode = #tpu.pipeline_mode<synchronous>, transform_indices = @transform_11, window_bounds = array<i64: 8, 2>}, {pipeline_mode = #tpu.pipeline_mode<synchronous>, transform_indices = @transform_12, window_bounds = array<i64: 1, 2>}, {transform_indices = @transform_13, window_bounds = array<i64: 4, 16, 2>}]} {
    %c0 = arith.constant 0 : index
    %c0_0 = arith.constant 0 : index
    %c0_1 = arith.constant 0 : index
    %0 = vector.load %arg1[%c0, %c0_0, %c0_1] : memref<4x16x32xf32, #tpu.memory_space<vmem>>, vector<4x16x32xf32>
    %1 = vector.shape_cast %0 : vector<4x16x32xf32> to vector<64x32xf32>
    %cst = arith.constant dense<0.000000e+00> : vector<64xf32>
    %2 = vector.multi_reduction <add>, %1, %cst [1] : vector<64x32xf32> to vector<64xf32>
    %3 = vector.shape_cast %2 : vector<64xf32> to vector<64x1xf32>
    %cst_2 = arith.constant 3.200000e+01 : f32
    %4 = vector.broadcast %cst_2 : f32 to vector<64x1xf32>
    %5 = arith.divf %3, %4 : vector<64x1xf32>
    %6 = vector.broadcast %5 : vector<64x1xf32> to vector<64x32xf32>
    %7 = arith.subf %1, %6 : vector<64x32xf32>
    %8 = arith.mulf %7, %7 : vector<64x32xf32>
    %cst_3 = arith.constant dense<0.000000e+00> : vector<64xf32>
    %9 = vector.multi_reduction <add>, %8, %cst_3 [1] : vector<64x32xf32> to vector<64xf32>
    %10 = vector.shape_cast %9 : vector<64xf32> to vector<64x1xf32>
    %cst_4 = arith.constant 3.200000e+01 : f32
    %11 = vector.broadcast %cst_4 : f32 to vector<64x1xf32>
    %12 = arith.divf %10, %11 : vector<64x1xf32>
    %13 = vector.broadcast %5 : vector<64x1xf32> to vector<64x32xf32>
    %14 = arith.subf %1, %13 : vector<64x32xf32>
    %cst_5 = arith.constant 9.99999974E-6 : f32
    %15 = vector.broadcast %cst_5 : f32 to vector<64x1xf32>
    %16 = arith.addf %12, %15 : vector<64x1xf32>
    %17 = math.rsqrt %16 : vector<64x1xf32>
    %18 = vector.broadcast %17 : vector<64x1xf32> to vector<64x32xf32>
    %19 = arith.mulf %14, %18 : vector<64x32xf32>
    %c0_6 = arith.constant 0 : index
    %c0_7 = arith.constant 0 : index
    %20 = vector.load %arg3[%c0_6, %c0_7] : memref<1x32xf32, #tpu.memory_space<vmem>>, vector<1x32xf32>
    %21 = vector.broadcast %20 : vector<1x32xf32> to vector<64x32xf32>
    %22 = arith.mulf %19, %21 : vector<64x32xf32>
    %c0_8 = arith.constant 0 : index
    %c0_9 = arith.constant 0 : index
    %23 = vector.load %arg4[%c0_8, %c0_9] : memref<1x32xf32, #tpu.memory_space<vmem>>, vector<1x32xf32>
    %24 = vector.broadcast %23 : vector<1x32xf32> to vector<64x32xf32>
    %25 = arith.addf %22, %24 : vector<64x32xf32>
    %c0_10 = arith.constant 0 : index
    %c0_11 = arith.constant 0 : index
    %26 = vector.load %arg5[%c0_10, %c0_11] : memref<32x32xf32, #tpu.memory_space<vmem>>, vector<32x32xf32>
    %cst_12 = arith.constant dense<0.000000e+00> : vector<64x32xf32>
    %27 = tpu.matmul %25, %26, %cst_12 {dimension_numbers = #tpu.dot_dimension_numbers<[1], [0], [0], [1], [0, 0, 1, 1], [], []>} : vector<64x32xf32>, vector<32x32xf32>, vector<64x32xf32> -> vector<64x32xf32>
    %c0_13 = arith.constant 0 : index
    %c0_14 = arith.constant 0 : index
    %28 = vector.load %arg6[%c0_13, %c0_14] : memref<1x32xf32, #tpu.memory_space<vmem>>, vector<1x32xf32>
    %29 = vector.broadcast %28 : vector<1x32xf32> to vector<64x32xf32>
    %30 = arith.addf %27, %29 : vector<64x32xf32>
    %cst_15 = arith.constant 5.000000e-01 : f32
    %31 = vector.broadcast %cst_15 : f32 to vector<64x32xf32>
    %32 = arith.mulf %31, %30 : vector<64x32xf32>
    %cst_16 = arith.constant 2.000000e+00 : f32
    %33 = math.sqrt %cst_16 : f32
    %cst_17 = arith.constant 1.000000e+00 : f32
    %34 = arith.divf %cst_17, %33 : f32
    %35 = vector.broadcast %34 : f32 to vector<64x32xf32>
    %36 = arith.mulf %30, %35 : vector<64x32xf32>
    %37 = math.erf %36 : vector<64x32xf32>
    %cst_18 = arith.constant 1.000000e+00 : f32
    %38 = vector.broadcast %cst_18 : f32 to vector<64x32xf32>
    %39 = arith.addf %38, %37 : vector<64x32xf32>
    %40 = arith.mulf %32, %39 : vector<64x32xf32>
    %41 = vector.extract_strided_slice %40 {offsets = [0, 0], sizes = [64, 16], strides = [1, 1]} : vector<64x32xf32> to vector<64x16xf32>
    %42 = vector.extract_strided_slice %40 {offsets = [0, 16], sizes = [64, 16], strides = [1, 1]} : vector<64x32xf32> to vector<64x16xf32>
    %43 = vector.shape_cast %42 : vector<64x16xf32> to vector<4x16x16xf32>
    %c0_19 = arith.constant 0 : index
    %c0_20 = arith.constant 0 : index
    %c0_21 = arith.constant 0 : index
    %44 = vector.load %arg2[%c0_19, %c0_20, %c0_21] : memref<4x1x16xf32, #tpu.memory_space<vmem>>, vector<4x1x16xf32>
    "tpu.trace_start"() <{level = 10 : i32, message = "bkn,bnc->bkc"}> : () -> ()
    %cst_22 = arith.constant dense<0.000000e+00> : vector<4x1x16xf32>
    %45 = tpu.matmul %44, %43, %cst_22 {dimension_numbers = #tpu.dot_dimension_numbers<[2], [1], [1], [2], [0, 0, 0, 1, 1, 2], [0], [0]>} : vector<4x1x16xf32>, vector<4x16x16xf32>, vector<4x1x16xf32> -> vector<4x1x16xf32>
    "tpu.trace_stop"() : () -> ()
    %46 = vector.shape_cast %45 : vector<4x1x16xf32> to vector<4x16xf32>
    %cst_23 = arith.constant dense<0.000000e+00> : vector<4x1xf32>
    %47 = vector.multi_reduction <add>, %44, %cst_23 [2] : vector<4x1x16xf32> to vector<4x1xf32>
    %48 = tpu.reciprocal %47 : vector<4x1xf32> -> vector<4x1xf32>
    %49 = vector.broadcast %48 : vector<4x1xf32> to vector<4x16xf32>
    %50 = arith.mulf %46, %49 : vector<4x16xf32>
    %c0_24 = arith.constant 0 : index
    %c0_25 = arith.constant 0 : index
    %51 = vector.load %arg7[%c0_24, %c0_25] : memref<16x16xf32, #tpu.memory_space<vmem>>, vector<16x16xf32>
    %cst_26 = arith.constant dense<0.000000e+00> : vector<64x16xf32>
    %52 = tpu.matmul %41, %51, %cst_26 {dimension_numbers = #tpu.dot_dimension_numbers<[1], [0], [0], [1], [0, 0, 1, 1], [], []>} : vector<64x16xf32>, vector<16x16xf32>, vector<64x16xf32> -> vector<64x16xf32>
    %c0_27 = arith.constant 0 : index
    %c0_28 = arith.constant 0 : index
    %53 = vector.load %arg8[%c0_27, %c0_28] : memref<16x16xf32, #tpu.memory_space<vmem>>, vector<16x16xf32>
    %cst_29 = arith.constant dense<0.000000e+00> : vector<4x16xf32>
    %54 = tpu.matmul %50, %53, %cst_29 {dimension_numbers = #tpu.dot_dimension_numbers<[1], [0], [0], [1], [0, 0, 1, 1], [], []>} : vector<4x16xf32>, vector<16x16xf32>, vector<4x16xf32> -> vector<4x16xf32>
    %55 = vector.shape_cast %52 : vector<64x16xf32> to vector<4x16x16xf32>
    %56 = vector.shape_cast %54 : vector<4x16xf32> to vector<4x1x16xf32>
    %57 = vector.broadcast %56 : vector<4x1x16xf32> to vector<4x16x16xf32>
    %58 = arith.addf %55, %57 : vector<4x16x16xf32>
    %c0_30 = arith.constant 0 : index
    %c0_31 = arith.constant 0 : index
    %59 = vector.load %arg9[%c0_30, %c0_31] : memref<1x16xf32, #tpu.memory_space<vmem>>, vector<1x16xf32>
    %60 = vector.shape_cast %59 : vector<1x16xf32> to vector<1x1x16xf32>
    %61 = vector.broadcast %60 : vector<1x1x16xf32> to vector<4x16x16xf32>
    %62 = arith.addf %58, %61 : vector<4x16x16xf32>
    %cst_32 = arith.constant 5.000000e-01 : f32
    %63 = vector.broadcast %cst_32 : f32 to vector<4x16x16xf32>
    %64 = arith.mulf %63, %62 : vector<4x16x16xf32>
    %cst_33 = arith.constant 2.000000e+00 : f32
    %65 = math.sqrt %cst_33 : f32
    %cst_34 = arith.constant 1.000000e+00 : f32
    %66 = arith.divf %cst_34, %65 : f32
    %67 = vector.broadcast %66 : f32 to vector<4x16x16xf32>
    %68 = arith.mulf %62, %67 : vector<4x16x16xf32>
    %69 = math.erf %68 : vector<4x16x16xf32>
    %cst_35 = arith.constant 1.000000e+00 : f32
    %70 = vector.broadcast %cst_35 : f32 to vector<4x16x16xf32>
    %71 = arith.addf %70, %69 : vector<4x16x16xf32>
    %72 = arith.mulf %64, %71 : vector<4x16x16xf32>
    %73 = vector.shape_cast %72 : vector<4x16x16xf32> to vector<64x16xf32>
    %c0_36 = arith.constant 0 : index
    %c0_37 = arith.constant 0 : index
    %74 = vector.load %arg10[%c0_36, %c0_37] : memref<16x8xf32, #tpu.memory_space<vmem>>, vector<16x8xf32>
    %cst_38 = arith.constant dense<0.000000e+00> : vector<64x8xf32>
    %75 = tpu.matmul %73, %74, %cst_38 {dimension_numbers = #tpu.dot_dimension_numbers<[1], [0], [0], [1], [0, 0, 1, 1], [], []>} : vector<64x16xf32>, vector<16x8xf32>, vector<64x8xf32> -> vector<64x8xf32>
    %c0_39 = arith.constant 0 : index
    %c0_40 = arith.constant 0 : index
    %76 = vector.load %arg11[%c0_39, %c0_40] : memref<1x8xf32, #tpu.memory_space<vmem>>, vector<1x8xf32>
    %77 = vector.broadcast %76 : vector<1x8xf32> to vector<64x8xf32>
    %78 = arith.addf %75, %77 : vector<64x8xf32>
    %cst_41 = arith.constant 5.000000e-01 : f32
    %79 = vector.broadcast %cst_41 : f32 to vector<64x8xf32>
    %80 = arith.mulf %79, %78 : vector<64x8xf32>
    %cst_42 = arith.constant 2.000000e+00 : f32
    %81 = math.sqrt %cst_42 : f32
    %cst_43 = arith.constant 1.000000e+00 : f32
    %82 = arith.divf %cst_43, %81 : f32
    %83 = vector.broadcast %82 : f32 to vector<64x8xf32>
    %84 = arith.mulf %78, %83 : vector<64x8xf32>
    %85 = math.erf %84 : vector<64x8xf32>
    %cst_44 = arith.constant 1.000000e+00 : f32
    %86 = vector.broadcast %cst_44 : f32 to vector<64x8xf32>
    %87 = arith.addf %86, %85 : vector<64x8xf32>
    %88 = arith.mulf %80, %87 : vector<64x8xf32>
    %c0_45 = arith.constant 0 : index
    %c0_46 = arith.constant 0 : index
    %89 = vector.load %arg12[%c0_45, %c0_46] : memref<8x2xf32, #tpu.memory_space<vmem>>, vector<8x2xf32>
    %cst_47 = arith.constant dense<0.000000e+00> : vector<64x2xf32>
    %90 = tpu.matmul %88, %89, %cst_47 {dimension_numbers = #tpu.dot_dimension_numbers<[1], [0], [0], [1], [0, 0, 1, 1], [], []>} : vector<64x8xf32>, vector<8x2xf32>, vector<64x2xf32> -> vector<64x2xf32>
    %c0_48 = arith.constant 0 : index
    %c0_49 = arith.constant 0 : index
    %91 = vector.load %arg13[%c0_48, %c0_49] : memref<1x2xf32, #tpu.memory_space<vmem>>, vector<1x2xf32>
    %92 = vector.broadcast %91 : vector<1x2xf32> to vector<64x2xf32>
    %93 = arith.addf %90, %92 : vector<64x2xf32>
    %94 = vector.extract_strided_slice %93 {offsets = [0, 0], sizes = [64, 1], strides = [1, 1]} : vector<64x2xf32> to vector<64x1xf32>
    %95 = vector.extract_strided_slice %93 {offsets = [0, 1], sizes = [64, 1], strides = [1, 1]} : vector<64x2xf32> to vector<64x1xf32>
    %96 = arith.maximumf %94, %95 : vector<64x1xf32>
    %97 = arith.subf %94, %96 : vector<64x1xf32>
    %98 = math.exp %97 : vector<64x1xf32>
    %99 = arith.subf %95, %96 : vector<64x1xf32>
    %100 = math.exp %99 : vector<64x1xf32>
    %101 = arith.addf %98, %100 : vector<64x1xf32>
    %102 = math.log %101 : vector<64x1xf32>
    %103 = arith.addf %96, %102 : vector<64x1xf32>
    %104 = vector.broadcast %103 : vector<64x1xf32> to vector<64x2xf32>
    %105 = arith.subf %93, %104 : vector<64x2xf32>
    %106 = vector.shape_cast %105 : vector<64x2xf32> to vector<4x16x2xf32>
    %c0_50 = arith.constant 0 : index
    %c0_51 = arith.constant 0 : index
    %c0_52 = arith.constant 0 : index
    %107 = vector.load %arg14[%c0_50, %c0_51, %c0_52] : memref<4x16x2xf32, #tpu.memory_space<vmem>>, vector<4x16x2xf32>
    tpu.vector_store %arg14[%c0_50, %c0_51, %c0_52], %106 {strides = array<i32>} : memref<4x16x2xf32, #tpu.memory_space<vmem>>, vector<4x16x2xf32>,
    return
  }
  func.func @transform_0(%arg0: i32) -> (i32, i32, i32) {
    %c0_i32 = arith.constant 0 : i32
    %c0_i32_0 = arith.constant 0 : i32
    %c0_i32_1 = arith.constant 0 : i32
    return %arg0, %c0_i32, %c0_i32_0 : i32, i32, i32
  }
  func.func @transform_1(%arg0: i32) -> (i32, i32, i32) {
    %c0_i32 = arith.constant 0 : i32
    %c0_i32_0 = arith.constant 0 : i32
    %c0_i32_1 = arith.constant 0 : i32
    return %arg0, %c0_i32, %c0_i32_0 : i32, i32, i32
  }
  func.func @transform_2(%arg0: i32) -> (i32, i32) {
    %c0_i32 = arith.constant 0 : i32
    %c0_i32_0 = arith.constant 0 : i32
    %c0_i32_1 = arith.constant 0 : i32
    return %c0_i32, %c0_i32_0 : i32, i32
  }
  func.func @transform_3(%arg0: i32) -> (i32, i32) {
    %c0_i32 = arith.constant 0 : i32
    %c0_i32_0 = arith.constant 0 : i32
    %c0_i32_1 = arith.constant 0 : i32
    return %c0_i32, %c0_i32_0 : i32, i32
  }
  func.func @transform_4(%arg0: i32) -> (i32, i32) {
    %c0_i32 = arith.constant 0 : i32
    %c0_i32_0 = arith.constant 0 : i32
    %c0_i32_1 = arith.constant 0 : i32
    return %c0_i32, %c0_i32_0 : i32, i32
  }
  func.func @transform_5(%arg0: i32) -> (i32, i32) {
    %c0_i32 = arith.constant 0 : i32
    %c0_i32_0 = arith.constant 0 : i32
    %c0_i32_1 = arith.constant 0 : i32
    return %c0_i32, %c0_i32_0 : i32, i32
  }
  func.func @transform_6(%arg0: i32) -> (i32, i32) {
    %c0_i32 = arith.constant 0 : i32
    %c0_i32_0 = arith.constant 0 : i32
    %c0_i32_1 = arith.constant 0 : i32
    return %c0_i32, %c0_i32_0 : i32, i32
  }
  func.func @transform_7(%arg0: i32) -> (i32, i32) {
    %c0_i32 = arith.constant 0 : i32
    %c0_i32_0 = arith.constant 0 : i32
    %c0_i32_1 = arith.constant 0 : i32
    return %c0_i32, %c0_i32_0 : i32, i32
  }
  func.func @transform_8(%arg0: i32) -> (i32, i32) {
    %c0_i32 = arith.constant 0 : i32
    %c0_i32_0 = arith.constant 0 : i32
    %c0_i32_1 = arith.constant 0 : i32
    return %c0_i32, %c0_i32_0 : i32, i32
  }
  func.func @transform_9(%arg0: i32) -> (i32, i32) {
    %c0_i32 = arith.constant 0 : i32
    %c0_i32_0 = arith.constant 0 : i32
    %c0_i32_1 = arith.constant 0 : i32
    return %c0_i32, %c0_i32_0 : i32, i32
  }
  func.func @transform_10(%arg0: i32) -> (i32, i32) {
    %c0_i32 = arith.constant 0 : i32
    %c0_i32_0 = arith.constant 0 : i32
    %c0_i32_1 = arith.constant 0 : i32
    return %c0_i32, %c0_i32_0 : i32, i32
  }
  func.func @transform_11(%arg0: i32) -> (i32, i32) {
    %c0_i32 = arith.constant 0 : i32
    %c0_i32_0 = arith.constant 0 : i32
    %c0_i32_1 = arith.constant 0 : i32
    return %c0_i32, %c0_i32_0 : i32, i32
  }
  func.func @transform_12(%arg0: i32) -> (i32, i32) {
    %c0_i32 = arith.constant 0 : i32
    %c0_i32_0 = arith.constant 0 : i32
    %c0_i32_1 = arith.constant 0 : i32
    return %c0_i32, %c0_i32_0 : i32, i32
  }
  func.func @transform_13(%arg0: i32) -> (i32, i32, i32) {
    %c0_i32 = arith.constant 0 : i32
    %c0_i32_0 = arith.constant 0 : i32
    %c0_i32_1 = arith.constant 0 : i32
    return %arg0, %c0_i32, %c0_i32_0 : i32, i32, i32
  }
}

</mosaic_0001>

<llo_original>
// kernel: tpu_custom_call.1
$region0: #{tpu_custom_call.1}
  #allocation0 [shape = 'u32[]', space=smem, size = 0x4, offset = 0x4, fixed_abs, tag = 'smem constant byte address 0x4 - core index']
  #allocation1 [shape = 'u32[144,128]{1,0:T(1,128)}', space=vmem, size = 0x12000, scoped, tag = 'internal scratch']
  %s0 = inlined_call_operand.hbm [shape: f32[8,16,32], index: 0, kind: input, shape index: {}]
  %s1 = inlined_call_operand.hbm [shape: f32[8,1,16], index: 1, kind: input, shape index: {}]
  %s2 = inlined_call_operand.hbm [shape: f32[1,32], index: 2, kind: input, shape index: {}]
  %s3 = inlined_call_operand.hbm [shape: f32[1,32], index: 3, kind: input, shape index: {}]
  %s4 = inlined_call_operand.vmem [shape: f32[32,32], index: 4, kind: input, shape index: {}]
  %s5 = inlined_call_operand.hbm [shape: f32[1,32], index: 5, kind: input, shape index: {}]
  %s6 = inlined_call_operand.vmem [shape: f32[16,16], index: 6, kind: input, shape index: {}]
  %s7 = inlined_call_operand.hbm [shape: f32[16,16], index: 7, kind: input, shape index: {}]
  %s8 = inlined_call_operand.vmem [shape: f32[1,16], index: 8, kind: input, shape index: {}]
  %s9 = inlined_call_operand.vmem [shape: f32[16,8], index: 9, kind: input, shape index: {}]
  %s10 = inlined_call_operand.vmem [shape: f32[1,8], index: 10, kind: input, shape index: {}]
  %s11 = inlined_call_operand.vmem [shape: f32[8,2], index: 11, kind: input, shape index: {}]
  %s12 = inlined_call_operand.vmem [shape: f32[1,2], index: 12, kind: input, shape index: {}]
  %s13 = inlined_call_operand.vmem [shape: f32[8,16,2], index: 13, kind: output, shape index: {}]
  %s14 = sld [smem:[#allocation0]]
  $region109: #{tpu_custom_call.1} parent=0
    _
  %s16 = ssub.s32 1, %s14
  %s17 = scalar_select 0, %s16, %s14
  $region1: #{tpu_custom_call.1} parent=0
    #allocation2 [shape = 'u8[65536]{0}', space=vmem, size = 0x10000, scoped, tag = 'input window, operand 0']
    #allocation3 [shape = 's32[2]{0}', space=sflag, size = 0x8, scoped, tag = 'scoped memory for tpu_custom_call.1']
    #allocation4 [shape = 'u8[4096]{0}', space=vmem, size = 0x1000, scoped, tag = 'input window, operand 1']
    #allocation5 [shape = 's32[2]{0}', space=sflag, size = 0x8, scoped, tag = 'scoped memory for tpu_custom_call.1']
    #allocation6 [shape = 'u8[512]{0}', space=vmem, size = 0x400, scoped, tag = 'input window, operand 2, single buffered']
    #allocation7 [shape = 'u8[512]{0}', space=vmem, size = 0x400, scoped, tag = 'input window, operand 3, single buffered']
    #allocation8 [shape = 's32[1]{0}', space=sflag, size = 0x4, scoped, tag = 'scoped memory for tpu_custom_call.1']
    #allocation9 [shape = 'u8[512]{0}', space=vmem, size = 0x400, scoped, tag = 'input window, operand 5, single buffered']
    #allocation10 [shape = 'u8[8192]{0}', space=vmem, size = 0x2000, scoped, tag = 'input window, operand 7, single buffered']
    #allocation11 [shape = 's32[1]{0}', space=sflag, size = 0x4, scoped, tag = 'scoped memory for tpu_custom_call.1']
    %18 = vsyncpa [#allocation3], 0
    %s19 = scalar_lea.sflag [#allocation3], 1
    %20 = vsyncpa %s19, 0
    %21 = vsyncpa [#allocation5], 0
    %s22 = scalar_lea.sflag [#allocation5], 1
    %23 = vsyncpa %s22, 0
    %24 = vsyncpa [#allocation8], 0
    %25 = vsyncpa [#allocation11], 0
    loop: start=0, step=1, limit=4
    $region2: #{tpu_custom_call.1} parent=1 // loop_pre_header
      _
    $region3: #{tpu_custom_call.1} parent=1 // loop_header
      %s27 = sphi 0, %s31
      %p28 = scmp.ge.s32.totalorder %s27, 4
      %s37 = sphi 0, %s39
      %s40 = sphi 0, %s37
      %s41 = sphi 0, %s40
      %s57 = sphi 0, %s41
      %s63 = sphi 0, %s65
      %s66 = sphi 0, %s63
      %s67 = sphi 0, %s66
      %s83 = sphi 0, %s67
      %s87 = sphi 0, %s87
      %s89 = sphi 0, %s87
      %s90 = sphi 0, %s89
      %s104 = sphi 0, %s90
      %s108 = sphi 0, %s108
      %s110 = sphi 0, %s108
      %s111 = sphi 0, %s110
      %s125 = sphi 0, %s111
      %s129 = sphi 0, %s129
      %s131 = sphi 0, %s129
      %s132 = sphi 0, %s131
      %s146 = sphi 0, %s132
      %s150 = sphi 0, %s150
      %s152 = sphi 0, %s150
      %s153 = sphi 0, %s152
      %s167 = sphi 0, %s153
      %s171 = sphi 0, %s171
      %s173 = sphi 0, %s171
      %s174 = sphi 0, %s173
      %s188 = sphi 0, %s174
      %s192 = sphi 0, %s192
      %s194 = sphi 0, %s192
      %s195 = sphi 0, %s194
      %s209 = sphi 0, %s195
      %s213 = sphi 0, %s213
      %s215 = sphi 0, %s213
      %s216 = sphi 0, %s215
      %s230 = sphi 0, %s216
      %s234 = sphi 0, %s234
      %s236 = sphi 0, %s234
      %s237 = sphi 0, %s236
      %s251 = sphi 0, %s237
      %s255 = sphi 0, %s255
      %s257 = sphi 0, %s255
      %s258 = sphi 0, %s257
      %s272 = sphi 0, %s258
      %s276 = sphi 0, %s276
      %s278 = sphi 0, %s276
      %s279 = sphi 0, %s278
      %s293 = sphi 0, %s279
      %s297 = sphi 0, %s297
      %s299 = sphi 0, %s297
      %s300 = sphi 0, %s299
      %s314 = sphi 0, %s300
      %s320 = sphi 0, %s322
      %s323 = sphi 0, %s320
      %s324 = sphi 0, %s323
      %s340 = sphi 0, %s324
    $region4: #{tpu_custom_call.1} parent=1 // loop_header_branch
      %30 = sbr.rel (%p28) target = $region8
    $region5: #{tpu_custom_call.1} parent=1 // loop_body
      %s32 = ssub.s32 %s27, 1
      %s33 = ssub.s32 %s27, 2
      %s34 = sadd.s32 %s27, 1
      %s35 = ssub.s32 %s27, %s34
      %p36 = scmp.eq.s32.totalorder %s35, 0
      %s38 = sadd.s32 %s37, 1
      %s39 = scalar_select %p36, %s37, %s38
      %p42 = pneg %p36
      %p43 = scmp.eq.s32.totalorder %s27, 1
      %p44 = por %p42, %p43
      %p45 = scmp.ne.s32.totalorder %s37, %s40
      %p46 = scmp.eq.s32.totalorder %s27, 0
      %p47 = por %p45, %p46
      %p48 = scmp.ne.s32.totalorder %s37, %s40
      %p49 = scmp.eq.s32.totalorder %s32, 1
      %p50 = por %p48, %p49
      %p51 = scmp.ne.s32.totalorder %s40, %s41
      %p52 = scmp.eq.s32.totalorder %s32, 0
      %p53 = por %p51, %p52
      %p54 = scmp.ne.s32.totalorder %s40, %s41
      %p55 = scmp.eq.s32.totalorder %s33, 1
      %p56 = por %p54, %p55
      %p58 = scmp.ne.s32.totalorder %s41, %s57
      %p59 = scmp.eq.s32.totalorder %s33, 0
      %p60 = por %p58, %p59
      %s61 = ssub.s32 %s27, %s34
      %p62 = scmp.eq.s32.totalorder %s61, 0
      %s64 = sadd.s32 %s63, 1
      %s65 = scalar_select %p62, %s63, %s64
      %p68 = pneg %p62
      %p69 = scmp.eq.s32.totalorder %s27, 1
      %p70 = por %p68, %p69
      %p71 = scmp.ne.s32.totalorder %s63, %s66
      %p72 = scmp.eq.s32.totalorder %s27, 0
      %p73 = por %p71, %p72
      %p74 = scmp.ne.s32.totalorder %s63, %s66
      %p75 = scmp.eq.s32.totalorder %s32, 1
      %p76 = por %p74, %p75
      %p77 = scmp.ne.s32.totalorder %s66, %s67
      %p78 = scmp.eq.s32.totalorder %s32, 0
      %p79 = por %p77, %p78
      %p80 = scmp.ne.s32.totalorder %s66, %s67
      %p81 = scmp.eq.s32.totalorder %s33, 1
      %p82 = por %p80, %p81
      %p84 = scmp.ne.s32.totalorder %s67, %s83
      %p85 = scmp.eq.s32.totalorder %s33, 0
      %p86 = por %p84, %p85
      %s88 = sadd.s32 %s87, 1
      %p91 = scmp.eq.s32.totalorder %s27, 1
      %p92 = scmp.ne.s32.totalorder %s87, %s89
      %p93 = scmp.eq.s32.totalorder %s27, 0
      %p94 = por %p92, %p93
      %p95 = scmp.ne.s32.totalorder %s87, %s89
      %p96 = scmp.eq.s32.totalorder %s32, 1
      %p97 = por %p95, %p96
      %p98 = scmp.ne.s32.totalorder %s89, %s90
      %p99 = scmp.eq.s32.totalorder %s32, 0
      %p100 = por %p98, %p99
      %p101 = scmp.ne.s32.totalorder %s89, %s90
      %p102 = scmp.eq.s32.totalorder %s33, 1
      %p103 = por %p101, %p102
      %p105 = scmp.ne.s32.totalorder %s90, %s104
      %p106 = scmp.eq.s32.totalorder %s33, 0
      %p107 = por %p105, %p106
      %s109 = sadd.s32 %s108, 1
      %p112 = scmp.eq.s32.totalorder %s27, 1
      %p113 = scmp.ne.s32.totalorder %s108, %s110
      %p114 = scmp.eq.s32.totalorder %s27, 0
      %p115 = por %p113, %p114
      %p116 = scmp.ne.s32.totalorder %s108, %s110
      %p117 = scmp.eq.s32.totalorder %s32, 1
      %p118 = por %p116, %p117
      %p119 = scmp.ne.s32.totalorder %s110, %s111
      %p120 = scmp.eq.s32.totalorder %s32, 0
      %p121 = por %p119, %p120
      %p122 = scmp.ne.s32.totalorder %s110, %s111
      %p123 = scmp.eq.s32.totalorder %s33, 1
      %p124 = por %p122, %p123
      %p126 = scmp.ne.s32.totalorder %s111, %s125
      %p127 = scmp.eq.s32.totalorder %s33, 0
      %p128 = por %p126, %p127
      %s130 = sadd.s32 %s129, 1
      %p133 = scmp.eq.s32.totalorder %s27, 1
      %p134 = scmp.ne.s32.totalorder %s129, %s131
      %p135 = scmp.eq.s32.totalorder %s27, 0
      %p136 = por %p134, %p135
      %p137 = scmp.ne.s32.totalorder %s129, %s131
      %p138 = scmp.eq.s32.totalorder %s32, 1
      %p139 = por %p137, %p138
      %p140 = scmp.ne.s32.totalorder %s131, %s132
      %p141 = scmp.eq.s32.totalorder %s32, 0
      %p142 = por %p140, %p141
      %p143 = scmp.ne.s32.totalorder %s131, %s132
      %p144 = scmp.eq.s32.totalorder %s33, 1
      %p145 = por %p143, %p144
      %p147 = scmp.ne.s32.totalorder %s132, %s146
      %p148 = scmp.eq.s32.totalorder %s33, 0
      %p149 = por %p147, %p148
      %s151 = sadd.s32 %s150, 1
      %p154 = scmp.eq.s32.totalorder %s27, 1
      %p155 = scmp.ne.s32.totalorder %s150, %s152
      %p156 = scmp.eq.s32.totalorder %s27, 0
      %p157 = por %p155, %p156
      %p158 = scmp.ne.s32.totalorder %s150, %s152
      %p159 = scmp.eq.s32.totalorder %s32, 1
      %p160 = por %p158, %p159
      %p161 = scmp.ne.s32.totalorder %s152, %s153
      %p162 = scmp.eq.s32.totalorder %s32, 0
      %p163 = por %p161, %p162
      %p164 = scmp.ne.s32.totalorder %s152, %s153
      %p165 = scmp.eq.s32.totalorder %s33, 1
      %p166 = por %p164, %p165
      %p168 = scmp.ne.s32.totalorder %s153, %s167
      %p169 = scmp.eq.s32.totalorder %s33, 0
      %p170 = por %p168, %p169
      %s172 = sadd.s32 %s171, 1
      %p175 = scmp.eq.s32.totalorder %s27, 1
      %p176 = scmp.ne.s32.totalorder %s171, %s173
      %p177 = scmp.eq.s32.totalorder %s27, 0
      %p178 = por %p176, %p177
      %p179 = scmp.ne.s32.totalorder %s171, %s173
      %p180 = scmp.eq.s32.totalorder %s32, 1
      %p181 = por %p179, %p180
      %p182 = scmp.ne.s32.totalorder %s173, %s174
      %p183 = scmp.eq.s32.totalorder %s32, 0
      %p184 = por %p182, %p183
      %p185 = scmp.ne.s32.totalorder %s173, %s174
      %p186 = scmp.eq.s32.totalorder %s33, 1
      %p187 = por %p185, %p186
      %p189 = scmp.ne.s32.totalorder %s174, %s188
      %p190 = scmp.eq.s32.totalorder %s33, 0
      %p191 = por %p189, %p190
      %s193 = sadd.s32 %s192, 1
      %p196 = scmp.eq.s32.totalorder %s27, 1
      %p197 = scmp.ne.s32.totalorder %s192, %s194
      %p198 = scmp.eq.s32.totalorder %s27, 0
      %p199 = por %p197, %p198
      %p200 = scmp.ne.s32.totalorder %s192, %s194
      %p201 = scmp.eq.s32.totalorder %s32, 1
      %p202 = por %p200, %p201
      %p203 = scmp.ne.s32.totalorder %s194, %s195
      %p204 = scmp.eq.s32.totalorder %s32, 0
      %p205 = por %p203, %p204
      %p206 = scmp.ne.s32.totalorder %s194, %s195
      %p207 = scmp.eq.s32.totalorder %s33, 1
      %p208 = por %p206, %p207
      %p210 = scmp.ne.s32.totalorder %s195, %s209
      %p211 = scmp.eq.s32.totalorder %s33, 0
      %p212 = por %p210, %p211
      %s214 = sadd.s32 %s213, 1
      %p217 = scmp.eq.s32.totalorder %s27, 1
      %p218 = scmp.ne.s32.totalorder %s213, %s215
      %p219 = scmp.eq.s32.totalorder %s27, 0
      %p220 = por %p218, %p219
      %p221 = scmp.ne.s32.totalorder %s213, %s215
      %p222 = scmp.eq.s32.totalorder %s32, 1
      %p223 = por %p221, %p222
      %p224 = scmp.ne.s32.totalorder %s215, %s216
      %p225 = scmp.eq.s32.totalorder %s32, 0
      %p226 = por %p224, %p225
      %p227 = scmp.ne.s32.totalorder %s215, %s216
      %p228 = scmp.eq.s32.totalorder %s33, 1
      %p229 = por %p227, %p228
      %p231 = scmp.ne.s32.totalorder %s216, %s230
      %p232 = scmp.eq.s32.totalorder %s33, 0
      %p233 = por %p231, %p232
      %s235 = sadd.s32 %s234, 1
      %p238 = scmp.eq.s32.totalorder %s27, 1
      %p239 = scmp.ne.s32.totalorder %s234, %s236
      %p240 = scmp.eq.s32.totalorder %s27, 0
      %p241 = por %p239, %p240
      %p242 = scmp.ne.s32.totalorder %s234, %s236
      %p243 = scmp.eq.s32.totalorder %s32, 1
      %p244 = por %p242, %p243
      %p245 = scmp.ne.s32.totalorder %s236, %s237
      %p246 = scmp.eq.s32.totalorder %s32, 0
      %p247 = por %p245, %p246
      %p248 = scmp.ne.s32.totalorder %s236, %s237
      %p249 = scmp.eq.s32.totalorder %s33, 1
      %p250 = por %p248, %p249
      %p252 = scmp.ne.s32.totalorder %s237, %s251
      %p253 = scmp.eq.s32.totalorder %s33, 0
      %p254 = por %p252, %p253
      %s256 = sadd.s32 %s255, 1
      %p259 = scmp.eq.s32.totalorder %s27, 1
      %p260 = scmp.ne.s32.totalorder %s255, %s257
      %p261 = scmp.eq.s32.totalorder %s27, 0
      %p262 = por %p260, %p261
      %p263 = scmp.ne.s32.totalorder %s255, %s257
      %p264 = scmp.eq.s32.totalorder %s32, 1
      %p265 = por %p263, %p264
      %p266 = scmp.ne.s32.totalorder %s257, %s258
      %p267 = scmp.eq.s32.totalorder %s32, 0
      %p268 = por %p266, %p267
      %p269 = scmp.ne.s32.totalorder %s257, %s258
      %p270 = scmp.eq.s32.totalorder %s33, 1
      %p271 = por %p269, %p270
      %p273 = scmp.ne.s32.totalorder %s258, %s272
      %p274 = scmp.eq.s32.totalorder %s33, 0
      %p275 = por %p273, %p274
      %s277 = sadd.s32 %s276, 1
      %p280 = scmp.eq.s32.totalorder %s27, 1
      %p281 = scmp.ne.s32.totalorder %s276, %s278
      %p282 = scmp.eq.s32.totalorder %s27, 0
      %p283 = por %p281, %p282
      %p284 = scmp.ne.s32.totalorder %s276, %s278
      %p285 = scmp.eq.s32.totalorder %s32, 1
      %p286 = por %p284, %p285
      %p287 = scmp.ne.s32.totalorder %s278, %s279
      %p288 = scmp.eq.s32.totalorder %s32, 0
      %p289 = por %p287, %p288
      %p290 = scmp.ne.s32.totalorder %s278, %s279
      %p291 = scmp.eq.s32.totalorder %s33, 1
      %p292 = por %p290, %p291
      %p294 = scmp.ne.s32.totalorder %s279, %s293
      %p295 = scmp.eq.s32.totalorder %s33, 0
      %p296 = por %p294, %p295
      %s298 = sadd.s32 %s297, 1
      %p301 = scmp.eq.s32.totalorder %s27, 1
      %p302 = scmp.ne.s32.totalorder %s297, %s299
      %p303 = scmp.eq.s32.totalorder %s27, 0
      %p304 = por %p302, %p303
      %p305 = scmp.ne.s32.totalorder %s297, %s299
      %p306 = scmp.eq.s32.totalorder %s32, 1
      %p307 = por %p305, %p306
      %p308 = scmp.ne.s32.totalorder %s299, %s300
      %p309 = scmp.eq.s32.totalorder %s32, 0
      %p310 = por %p308, %p309
      %p311 = scmp.ne.s32.totalorder %s299, %s300
      %p312 = scmp.eq.s32.totalorder %s33, 1
      %p313 = por %p311, %p312
      %p315 = scmp.ne.s32.totalorder %s300, %s314
      %p316 = scmp.eq.s32.totalorder %s33, 0
      %p317 = por %p315, %p316
      %s318 = ssub.s32 %s27, %s34
      %p319 = scmp.eq.s32.totalorder %s318, 0
      %s321 = sadd.s32 %s320, 1
      %s322 = scalar_select %p319, %s320, %s321
      %p325 = pneg %p319
      %p326 = scmp.eq.s32.totalorder %s27, 1
      %p327 = por %p325, %p326
      %p328 = scmp.ne.s32.totalorder %s320, %s323
      %p329 = scmp.eq.s32.totalorder %s27, 0
      %p330 = por %p328, %p329
      %p331 = scmp.ne.s32.totalorder %s320, %s323
      %p332 = scmp.eq.s32.totalorder %s32, 1
      %p333 = por %p331, %p332
      %p334 = scmp.ne.s32.totalorder %s323, %s324
      %p335 = scmp.eq.s32.totalorder %s32, 0
      %p336 = por %p334, %p335
      %p337 = scmp.ne.s32.totalorder %s323, %s324
      %p338 = scmp.eq.s32.totalorder %s33, 1
      %p339 = por %p337, %p338
      %p341 = scmp.ne.s32.totalorder %s324, %s340
      %p342 = scmp.eq.s32.totalorder %s33, 0
      %p343 = por %p341, %p342
      %p344 = scmp.le.s32.totalorder 1, %s27
      %p345 = scmp.lt.s32.totalorder %s27, 3
      %p346 = pnand %p344, %p345
      %p347 = pneg %p346
      // Predicated region
      $region9: #{tpu_custom_call.1} parent=5 // pred_check
        _
      $region10: #{tpu_custom_call.1} parent=5 // pred_check_branch
        %349 = sbr.rel (%p346) target = $region12
      $region11: #{tpu_custom_call.1} parent=5 // pred_region
        %s350 = ssub.s32 %s27, 1
        // Predicated region
        $region13: #{tpu_custom_call.1} parent=11 // pred_check
          %p351 = pneg %p100
        $region14: #{tpu_custom_call.1} parent=11 // pred_check_branch
          %353 = sbr.rel (%p351) target = $region16
        $region15: #{tpu_custom_call.1} parent=11 // pred_region
          %s355 = ssub.s32 16, 16
          %356 = vsyncadd [#allocation5], %s355
          %s358 = sshll.u32 [#allocation6], 4
          %s359 = int_to_ptr.vmem [resolvable:$true] %s358
          %361 = dma.hbm_to_vmem [thread:$0]  %s2, 16, %s359, [#allocation5]
        $region16: #{tpu_custom_call.1} parent=11 // pred_fallthru
          _
        // Predicated region
        $region17: #{tpu_custom_call.1} parent=11 // pred_check
          %p362 = pneg %p121
        $region18: #{tpu_custom_call.1} parent=11 // pred_check_branch
          %364 = sbr.rel (%p362) target = $region20
        $region19: #{tpu_custom_call.1} parent=11 // pred_region
          %s366 = ssub.s32 16, 16
          %367 = vsyncadd [#allocation8], %s366
          %s369 = sshll.u32 [#allocation7], 4
          %s370 = int_to_ptr.vmem [resolvable:$true] %s369
          %372 = dma.hbm_to_vmem [thread:$0]  %s3, 16, %s370, [#allocation8]
        $region20: #{tpu_custom_call.1} parent=11 // pred_fallthru
          _
        // Predicated region
        $region21: #{tpu_custom_call.1} parent=11 // pred_check
          %p373 = pneg %p142
        $region22: #{tpu_custom_call.1} parent=11 // pred_check_branch
          %375 = sbr.rel (%p373) target = $region24
        $region23: #{tpu_custom_call.1} parent=11 // pred_region
          _
        $region24: #{tpu_custom_call.1} parent=11 // pred_fallthru
          _
        // Predicated region
        $region25: #{tpu_custom_call.1} parent=11 // pred_check
          %p376 = pneg %p163
        $region26: #{tpu_custom_call.1} parent=11 // pred_check_branch
          %378 = sbr.rel (%p376) target = $region28
        $region27: #{tpu_custom_call.1} parent=11 // pred_region
          %s380 = ssub.s32 16, 16
          %381 = vsyncadd [#allocation8], %s380
          %s383 = sshll.u32 [#allocation9], 4
          %s384 = int_to_ptr.vmem [resolvable:$true] %s383
          %386 = dma.hbm_to_vmem [thread:$0]  %s5, 16, %s384, [#allocation8]
        $region28: #{tpu_custom_call.1} parent=11 // pred_fallthru
          _
        // Predicated region
        $region29: #{tpu_custom_call.1} parent=11 // pred_check
          %p387 = pneg %p184
        $region30: #{tpu_custom_call.1} parent=11 // pred_check_branch
          %389 = sbr.rel (%p387) target = $region32
        $region31: #{tpu_custom_call.1} parent=11 // pred_region
          _
        $region32: #{tpu_custom_call.1} parent=11 // pred_fallthru
          _
        // Predicated region
        $region33: #{tpu_custom_call.1} parent=11 // pred_check
          %p390 = pneg %p205
        $region34: #{tpu_custom_call.1} parent=11 // pred_check_branch
          %392 = sbr.rel (%p390) target = $region36
        $region35: #{tpu_custom_call.1} parent=11 // pred_region
          %s394 = ssub.s32 256, 256
          %395 = vsyncadd [#allocation11], %s394
          %s396 = sshll.u32 [#allocation10], 4
          %s397 = int_to_ptr.vmem [resolvable:$true] %s396
          %402 = dma.hbm_to_vmem [thread:$0]  %s7, 256, %s397, [#allocation11], 128, 128, 8
        $region36: #{tpu_custom_call.1} parent=11 // pred_fallthru
          _
        // Predicated region
        $region37: #{tpu_custom_call.1} parent=11 // pred_check
          %p403 = pneg %p226
        $region38: #{tpu_custom_call.1} parent=11 // pred_check_branch
          %405 = sbr.rel (%p403) target = $region40
        $region39: #{tpu_custom_call.1} parent=11 // pred_region
          _
        $region40: #{tpu_custom_call.1} parent=11 // pred_fallthru
          _
        // Predicated region
        $region41: #{tpu_custom_call.1} parent=11 // pred_check
          %p406 = pneg %p247
        $region42: #{tpu_custom_call.1} parent=11 // pred_check_branch
          %408 = sbr.rel (%p406) target = $region44
        $region43: #{tpu_custom_call.1} parent=11 // pred_region
          _
        $region44: #{tpu_custom_call.1} parent=11 // pred_fallthru
          _
        // Predicated region
        $region45: #{tpu_custom_call.1} parent=11 // pred_check
          %p409 = pneg %p268
        $region46: #{tpu_custom_call.1} parent=11 // pred_check_branch
          %411 = sbr.rel (%p409) target = $region48
        $region47: #{tpu_custom_call.1} parent=11 // pred_region
          _
        $region48: #{tpu_custom_call.1} parent=11 // pred_fallthru
          _
        // Predicated region
        $region49: #{tpu_custom_call.1} parent=11 // pred_check
          %p412 = pneg %p289
        $region50: #{tpu_custom_call.1} parent=11 // pred_check_branch
          %414 = sbr.rel (%p412) target = $region52
        $region51: #{tpu_custom_call.1} parent=11 // pred_region
          _
        $region52: #{tpu_custom_call.1} parent=11 // pred_fallthru
          _
        // Predicated region
        $region53: #{tpu_custom_call.1} parent=11 // pred_check
          %p415 = pneg %p310
        $region54: #{tpu_custom_call.1} parent=11 // pred_check_branch
          %417 = sbr.rel (%p415) target = $region56
        $region55: #{tpu_custom_call.1} parent=11 // pred_region
          _
        $region56: #{tpu_custom_call.1} parent=11 // pred_fallthru
          _
      $region12: #{tpu_custom_call.1} parent=5 // pred_fallthru
        _
      %p418 = scmp.lt.s32.totalorder %s27, 2
      // Predicated region
      $region57: #{tpu_custom_call.1} parent=5 // pred_check
        %p419 = pneg %p418
      $region58: #{tpu_custom_call.1} parent=5 // pred_check_branch
        %421 = sbr.rel (%p419) target = $region60
      $region59: #{tpu_custom_call.1} parent=5 // pred_region
        // Predicated region
        $region61: #{tpu_custom_call.1} parent=59 // pred_check
          %p422 = pneg %p47
        $region62: #{tpu_custom_call.1} parent=59 // pred_check_branch
          %424 = sbr.rel (%p422) target = $region64
        $region63: #{tpu_custom_call.1} parent=59 // pred_region
          %s425 = sand.u32 %s37, 1
          %s426 = scalar_lea.sflag [#allocation3], %s425
          %s427 = sand.u32 %s37, 1
          %s428 = smul.addr %s427, 64
          %s429 = scalar_lea.vmem [#allocation2], %s428
          %s430 = smul.u32 4, %s27
          %s432 = ssub.s32 1024, 1024
          %433 = vsyncadd %s426, %s432
          %s434 = smul.addr %s430, 2
          %s435 = smul.addr %s434, 128
          %s436 = scalar_lea.hbm %s0, %s435
          %s437 = sshll.u32 %s429, 4
          %s438 = int_to_ptr.vmem [resolvable:$true] %s437
          %443 = dma.hbm_to_vmem [thread:$0]  %s436, 1024, %s438, %s426, 128, 128, 8
        $region64: #{tpu_custom_call.1} parent=59 // pred_fallthru
          _
        // Predicated region
        $region65: #{tpu_custom_call.1} parent=59 // pred_check
          %p444 = pneg %p73
        $region66: #{tpu_custom_call.1} parent=59 // pred_check_branch
          %446 = sbr.rel (%p444) target = $region68
        $region67: #{tpu_custom_call.1} parent=59 // pred_region
          %s447 = sand.u32 %s27, 1
          %s448 = scalar_lea.sflag [#allocation5], %s447
          %s449 = sand.u32 %s63, 1
          %s450 = smul.addr %s449, 4
          %s451 = scalar_lea.vmem [#allocation4], %s450
          %s452 = smul.u32 4, %s27
          %s454 = ssub.s32 64, 64
          %455 = vsyncadd %s448, %s454
          %s456 = smul.addr %s452, 16
          %s457 = scalar_lea.hbm %s1, %s456
          %s458 = sshll.u32 %s451, 4
          %s459 = int_to_ptr.vmem [resolvable:$true] %s458
          %464 = dma.hbm_to_vmem [thread:$0]  %s457, 64, %s459, %s448, 16, 16, 1
        $region68: #{tpu_custom_call.1} parent=59 // pred_fallthru
          _
      $region60: #{tpu_custom_call.1} parent=5 // pred_fallthru
        _
      %p465 = scmp.le.s32.totalorder 1, %s27
      %p466 = scmp.lt.s32.totalorder %s27, 3
      %p467 = pnand %p465, %p466
      %p468 = pneg %p467
      // Predicated region
      $region69: #{tpu_custom_call.1} parent=5 // pred_check
        _
      $region70: #{tpu_custom_call.1} parent=5 // pred_check_branch
        %470 = sbr.rel (%p467) target = $region72
      $region71: #{tpu_custom_call.1} parent=5 // pred_region
        %s471 = ssub.s32 %s27, 1
        %s472 = sand.u32 %s40, 1
        %s473 = scalar_lea.sflag [#allocation3], %s472
        %s474 = sand.u32 %s40, 1
        %s475 = smul.addr %s474, 64
        %s476 = scalar_lea.vmem [#allocation2], %s475
        // Predicated region
        $region73: #{tpu_custom_call.1} parent=71 // pred_check
          %p477 = pneg %p53
        $region74: #{tpu_custom_call.1} parent=71 // pred_check_branch
          %479 = sbr.rel (%p477) target = $region76
        $region75: #{tpu_custom_call.1} parent=71 // pred_region
          %480 = dma.done %s473, 1024
        $region76: #{tpu_custom_call.1} parent=71 // pred_fallthru
          _
        %s481 = sand.u32 %s32, 1
        %s482 = scalar_lea.sflag [#allocation5], %s481
        %s483 = sand.u32 %s66, 1
        %s484 = smul.addr %s483, 4
        %s485 = scalar_lea.vmem [#allocation4], %s484
        // Predicated region
        $region77: #{tpu_custom_call.1} parent=71 // pred_check
          %p486 = pneg %p79
        $region78: #{tpu_custom_call.1} parent=71 // pred_check_branch
          %488 = sbr.rel (%p486) target = $region80
        $region79: #{tpu_custom_call.1} parent=71 // pred_region
          %489 = dma.done %s482, 64
        $region80: #{tpu_custom_call.1} parent=71 // pred_fallthru
          _
        // Predicated region
        $region81: #{tpu_custom_call.1} parent=71 // pred_check
          %p490 = pneg %p100
        $region82: #{tpu_custom_call.1} parent=71 // pred_check_branch
          %492 = sbr.rel (%p490) target = $region84
        $region83: #{tpu_custom_call.1} parent=71 // pred_region
          %493 = dma.done [#allocation5], 16
        $region84: #{tpu_custom_call.1} parent=71 // pred_fallthru
          _
        // Predicated region
        $region85: #{tpu_custom_call.1} parent=71 // pred_check
          %p494 = pneg %p121
        $region86: #{tpu_custom_call.1} parent=71 // pred_check_branch
          %496 = sbr.rel (%p494) target = $region88
        $region87: #{tpu_custom_call.1} parent=71 // pred_region
          %497 = dma.done [#allocation8], 16
        $region88: #{tpu_custom_call.1} parent=71 // pred_fallthru
          _
        // Predicated region
        $region89: #{tpu_custom_call.1} parent=71 // pred_check
          %p498 = pneg %p163
        $region90: #{tpu_custom_call.1} parent=71 // pred_check_branch
          %500 = sbr.rel (%p498) target = $region92
        $region91: #{tpu_custom_call.1} parent=71 // pred_region
          %501 = dma.done [#allocation8], 16
        $region92: #{tpu_custom_call.1} parent=71 // pred_fallthru
          _
        // Predicated region
        $region93: #{tpu_custom_call.1} parent=71 // pred_check
          %p502 = pneg %p205
        $region94: #{tpu_custom_call.1} parent=71 // pred_check_branch
          %504 = sbr.rel (%p502) target = $region96
        $region95: #{tpu_custom_call.1} parent=71 // pred_region
          %505 = dma.done [#allocation11], 256
        $region96: #{tpu_custom_call.1} parent=71 // pred_fallthru
          _
        %s506 = sand.u32 %s40, 1
        %s507 = scalar_lea.sflag [#allocation3], %s506
        %s508 = sand.u32 %s40, 1
        %s509 = smul.addr %s508, 64
        %s510 = scalar_lea.vmem [#allocation2], %s509
        %p511 = pneg %p53
        %p512 = pneg %p50
        %s513 = sand.u32 %s32, 1
        %s514 = scalar_lea.sflag [#allocation5], %s513
        %s515 = sand.u32 %s66, 1
        %s516 = smul.addr %s515, 4
        %s517 = scalar_lea.vmem [#allocation4], %s516
        %p518 = pneg %p79
        %p519 = pneg %p76
        %p520 = pneg %p100
        %p521 = pneg %p97
        %p522 = pneg %p121
        %p523 = pneg %p118
        %p524 = pneg %p142
        %p525 = pneg %p139
        %p526 = pneg %p163
        %p527 = pneg %p160
        %p528 = pneg %p184
        %p529 = pneg %p181
        %p530 = pneg %p205
        %p531 = pneg %p202
        %p532 = pneg %p226
        %p533 = pneg %p223
        %p534 = pneg %p247
        %p535 = pneg %p244
        %p536 = pneg %p268
        %p537 = pneg %p265
        %p538 = pneg %p289
        %p539 = pneg %p286
        %p540 = pneg %p310
        %p541 = pneg %p307
        %p542 = pneg %p336
        %p543 = pneg %p333
        %s544 = smul.u32 4, %s32
        %p545 = scmp.lt.s32.totalorder %s544, 7
        %s546 = scalar_select %p545, %s544, 7
        %s547 = smul.addr %s546, 2
        %s548 = smul.addr %s547, 8
        %s549 = scalar_lea.vmem %s13, %s548
        %s550 = smul.u32 4, %s32
        %s551 = smul.u32 4, %s32
        %s552 = smul.u32 4, %s32
        %p553 = scmp.lt.s32.totalorder %s552, 7
        %s554 = scalar_select %p553, %s552, 7
        %s555 = smul.addr %s554, 2
        %s556 = smul.addr %s555, 8
        %s557 = scalar_lea.vmem %s13, %s556
        %s558 = smul.u32 4, %s32
        %v559 = vld [vmem:[%s476] sm:$0xff]
        %v560 = vld [vmem:[%s476 + $0x8] sm:$0xff]
        %v561 = vld [vmem:[%s476 + $0x10] sm:$0xff]
        %v562 = vld [vmem:[%s476 + $0x18] sm:$0xff]
        %v563 = vld [vmem:[%s476 + $0x20] sm:$0xff]
        %v564 = vld [vmem:[%s476 + $0x28] sm:$0xff]
        %v565 = vld [vmem:[%s476 + $0x30] sm:$0xff]
        %v566 = vld [vmem:[%s476 + $0x38] sm:$0xff]
        %vm567 = vcmask 261120
        %v568 = vsel %vm567, %v559, 0.0
        %569 = vadd.xlane.f32.xlu0 %v568
        %v570 = vpop.xlane.xlu0 %569
        %v571 = vsel %vm567, %v560, 0.0
        %572 = vadd.xlane.f32.xlu0 %v571
        %v573 = vpop.xlane.xlu0 %572
        %v574 = vsel %vm567, %v561, 0.0
        %575 = vadd.xlane.f32.xlu0 %v574
        %v576 = vpop.xlane.xlu0 %575
        %v577 = vsel %vm567, %v562, 0.0
        %578 = vadd.xlane.f32.xlu0 %v577
        %v579 = vpop.xlane.xlu0 %578
        %v580 = vsel %vm567, %v563, 0.0
        %581 = vadd.xlane.f32.xlu0 %v580
        %v582 = vpop.xlane.xlu0 %581
        %v583 = vsel %vm567, %v564, 0.0
        %584 = vadd.xlane.f32.xlu0 %v583
        %v585 = vpop.xlane.xlu0 %584
        %v586 = vsel %vm567, %v565, 0.0
        %587 = vadd.xlane.f32.xlu0 %v586
        %v588 = vpop.xlane.xlu0 %587
        %v589 = vsel %vm567, %v566, 0.0
        %590 = vadd.xlane.f32.xlu0 %v589
        %v591 = vpop.xlane.xlu0 %590
        %v592 = vrcp.pop 32.0
        %v593 = vmul.f32 %v570, %v592
        %v594 = vmul.f32 %v573, %v592
        %v595 = vmul.f32 %v576, %v592
        %v596 = vmul.f32 %v579, %v592
        %v597 = vmul.f32 %v582, %v592
        %v598 = vmul.f32 %v585, %v592
        %v599 = vmul.f32 %v588, %v592
        %v600 = vmul.f32 %v591, %v592
        %v601 = vsub.f32 %v559, %v593
        %v602 = vsub.f32 %v560, %v594
        %v603 = vsub.f32 %v561, %v595
        %v604 = vsub.f32 %v562, %v596
        %v605 = vsub.f32 %v563, %v597
        %v606 = vsub.f32 %v564, %v598
        %v607 = vsub.f32 %v565, %v599
        %v608 = vsub.f32 %v566, %v600
        %v609 = vmul.f32 %v601, %v601
        %v610 = vmul.f32 %v602, %v602
        %v611 = vmul.f32 %v603, %v603
        %v612 = vmul.f32 %v604, %v604
        %v613 = vmul.f32 %v605, %v605
        %v614 = vmul.f32 %v606, %v606
        %v615 = vmul.f32 %v607, %v607
        %v616 = vmul.f32 %v608, %v608
        %v617 = vsel %vm567, %v609, 0.0
        %618 = vadd.xlane.f32.xlu0 %v617
        %v619 = vpop.xlane.xlu0 %618
        %v620 = vsel %vm567, %v610, 0.0
        %621 = vadd.xlane.f32.xlu0 %v620
        %v622 = vpop.xlane.xlu0 %621
        %v623 = vsel %vm567, %v611, 0.0
        %624 = vadd.xlane.f32.xlu0 %v623
        %v625 = vpop.xlane.xlu0 %624
        %v626 = vsel %vm567, %v612, 0.0
        %627 = vadd.xlane.f32.xlu0 %v626
        %v628 = vpop.xlane.xlu0 %627
        %v629 = vsel %vm567, %v613, 0.0
        %630 = vadd.xlane.f32.xlu0 %v629
        %v631 = vpop.xlane.xlu0 %630
        %v632 = vsel %vm567, %v614, 0.0
        %633 = vadd.xlane.f32.xlu0 %v632
        %v634 = vpop.xlane.xlu0 %633
        %v635 = vsel %vm567, %v615, 0.0
        %636 = vadd.xlane.f32.xlu0 %v635
        %v637 = vpop.xlane.xlu0 %636
        %v638 = vsel %vm567, %v616, 0.0
        %639 = vadd.xlane.f32.xlu0 %v638
        %v640 = vpop.xlane.xlu0 %639
        %v641 = vmul.f32 %v619, %v592
        %v642 = vmul.f32 %v622, %v592
        %v643 = vmul.f32 %v625, %v592
        %v644 = vmul.f32 %v628, %v592
        %v645 = vmul.f32 %v631, %v592
        %v646 = vmul.f32 %v634, %v592
        %v647 = vmul.f32 %v637, %v592
        %v648 = vmul.f32 %v640, %v592
        %v649 = vadd.f32 %v641, 1e-05
        %v650 = vadd.f32 %v642, 1e-05
        %v651 = vadd.f32 %v643, 1e-05
        %v652 = vadd.f32 %v644, 1e-05
        %v653 = vadd.f32 %v645, 1e-05
        %v654 = vadd.f32 %v646, 1e-05
        %v655 = vadd.f32 %v647, 1e-05
        %v656 = vadd.f32 %v648, 1e-05
        %v657 = vrsqrt.pop %v649
        %v658 = vrsqrt.pop %v650
        %v659 = vrsqrt.pop %v651
        %v660 = vrsqrt.pop %v652
        %v661 = vrsqrt.pop %v653
        %v662 = vrsqrt.pop %v654
        %v663 = vrsqrt.pop %v655
        %v664 = vrsqrt.pop %v656
        %v665 = vmul.f32 %v601, %v657
        %v666 = vmul.f32 %v602, %v658
        %v667 = vmul.f32 %v603, %v659
        %v668 = vmul.f32 %v604, %v660
        %v669 = vmul.f32 %v605, %v661
        %v670 = vmul.f32 %v606, %v662
        %v671 = vmul.f32 %v607, %v663
        %v672 = vmul.f32 %v608, %v664
        %v673 = vld [vmem:[#allocation6] sm:$0x1]
        %v675 = vlaneseq
        %v676 = vshrl.u32 %v675, 7
        %v677 = vsub.s32 0, %v676
        %v678 = vrot.slane %v673, %v677
        %v680 = vmul.f32 %v665, %v678
        %v681 = vmul.f32 %v666, %v678
        %v682 = vmul.f32 %v667, %v678
        %v683 = vmul.f32 %v668, %v678
        %v684 = vmul.f32 %v669, %v678
        %v685 = vmul.f32 %v670, %v678
        %v686 = vmul.f32 %v671, %v678
        %v687 = vmul.f32 %v672, %v678
        %v688 = vld [vmem:[#allocation7] sm:$0x1]
        %v690 = vlaneseq
        %v691 = vshrl.u32 %v690, 7
        %v692 = vsub.s32 0, %v691
        %v693 = vrot.slane %v688, %v692
        %v695 = vadd.f32 %v680, %v693
        %v696 = vadd.f32 %v681, %v693
        %v697 = vadd.f32 %v682, %v693
        %v698 = vadd.f32 %v683, %v693
        %v699 = vadd.f32 %v684, %v693
        %v700 = vadd.f32 %v685, %v693
        %v701 = vadd.f32 %v686, %v693
        %v702 = vadd.f32 %v687, %v693
        %v703 = vld [vmem:[%s4] sm:$0xff]
        %v704 = vld [vmem:[%s4 + $0x8] sm:$0xff]
        %v705 = vld [vmem:[%s4 + $0x10] sm:$0xff]
        %v706 = vld [vmem:[%s4 + $0x18] sm:$0xff]
        %v707 = vld [vmem:[#allocation9] sm:$0x1]
        %v709 = vlaneseq
        %v710 = vshrl.u32 %v709, 7
        %v711 = vsub.s32 0, %v710
        %v712 = vrot.slane %v707, %v711
        %v715 = vsel %vm567, %v695, 0
        %v718 = vsel %vm567, %v696, 0
        %v721 = vsel %vm567, %v697, 0
        %v724 = vsel %vm567, %v698, 0
        %v727 = vsel %vm567, %v699, 0
        %v730 = vsel %vm567, %v700, 0
        %v733 = vsel %vm567, %v701, 0
        %v736 = vsel %vm567, %v702, 0
        %738 = vmatprep.subr.mxu0 0.0
        %739 = vmatpush1.msra.mxu0 %v703
        %740 = vmatprep.subr.mxu0 0.0
        %741 = vmatpush1.msra.mxu0 %v704
        %742 = vmatprep.subr.mxu0 0.0
        %743 = vmatpush1.msra.mxu0 %v705
        %744 = vmatprep.subr.mxu0 0.0
        %745 = vmatpush1.msra.mxu0 %v706
        %746 = vmatprep.subr.mxu0 0.0
        %747 = vmatpush1.msra.mxu0 0.0
        %748 = vmatprep.subr.mxu0 0.0
        %749 = vmatpush1.msra.mxu0 0.0
        %750 = vmatprep.subr.mxu0 0.0
        %751 = vmatpush1.msra.mxu0 0.0
        %752 = vmatprep.subr.mxu0 0.0
        %753 = vmatpush1.msra.mxu0 0.0
        %754 = vmatprep.subr.mxu0 0.0
        %755 = vmatpush1.msra.mxu0 0.0
        %756 = vmatprep.subr.mxu0 0.0
        %757 = vmatpush1.msra.mxu0 0.0
        %758 = vmatprep.subr.mxu0 0.0
        %759 = vmatpush1.msra.mxu0 0.0
        %760 = vmatprep.subr.mxu0 0.0
        %761 = vmatpush1.msra.mxu0 0.0
        %762 = vmatprep.subr.mxu0 0.0
        %763 = vmatpush1.msra.mxu0 0.0
        %764 = vmatprep.subr.mxu0 0.0
        %765 = vmatpush1.msra.mxu0 0.0
        %766 = vmatprep.subr.mxu0 0.0
        %767 = vmatpush1.msra.mxu0 0.0
        %768 = vmatprep.subr.mxu0 0.0
        %769 = vmatpush1.msra.mxu0 0.0
        %770 = vmatprep.subr.mxu0 0.0
        %771 = vmatpush1.msra.mxu0 0.0
        %772 = vmatprep.subr.mxu0 0.0
        %773 = vmatpush1.msra.mxu0 0.0
        %774 = vmatprep.subr.mxu0 0.0
        %775 = vmatpush1.msra.mxu0 0.0
        %776 = vmatprep.subr.mxu0 0.0
        %777 = vmatpush1.msra.mxu0 0.0
        %778 = vmatprep.subr.mxu0 0.0
        %779 = vmatpush1.msra.mxu0 0.0
        %780 = vmatprep.subr.mxu0 0.0
        %781 = vmatpush1.msra.mxu0 0.0
        %782 = vmatprep.subr.mxu0 0.0
        %783 = vmatpush1.msra.mxu0 0.0
        %784 = vmatprep.subr.mxu0 0.0
        %785 = vmatpush1.msra.mxu0 0.0
        %786 = vmatprep.subr.mxu0 0.0
        %787 = vmatpush1.msra.mxu0 0.0
        %788 = vmatprep.subr.mxu0 0.0
        %789 = vmatpush1.msra.mxu0 0.0
        %790 = vmatprep.subr.mxu0 0.0
        %791 = vmatpush1.msra.mxu0 0.0
        %792 = vmatprep.subr.mxu0 0.0
        %793 = vmatpush1.msra.mxu0 0.0
        %794 = vmatprep.subr.mxu0 0.0
        %795 = vmatpush1.msra.mxu0 0.0
        %796 = vmatprep.subr.mxu0 0.0
        %797 = vmatpush1.msra.mxu0 0.0
        %798 = vmatprep.subr.mxu0 0.0
        %799 = vmatpush1.msra.mxu0 0.0
        %800 = vmatprep.subr.mxu0 0.0
        %801 = vmatpush1.msra.mxu0 0.0
        %802 = vmatprep.mubr.f32.mxu0 0.0
        %803 = vmatmul.mubr.f32.gmra.mrb[0].mxu0 %v715
        %v804 = vpop.f32.mrb[0].mxu0
        %v805 = vadd.f32 %v712, %v804
        %v806 = vpop.f32.mrb[0].mxu0
        %807 = vmatprep.mubr.f32.mxu0 0.0
        %808 = vmatmul.mubr.f32.gmra.mrb[0].mxu0 %v718
        %v809 = vpop.f32.mrb[0].mxu0
        %v810 = vadd.f32 %v712, %v809
        %v811 = vpop.f32.mrb[0].mxu0
        %812 = vmatprep.mubr.f32.mxu0 0.0
        %813 = vmatmul.mubr.f32.gmra.mrb[0].mxu0 %v721
        %v814 = vpop.f32.mrb[0].mxu0
        %v815 = vadd.f32 %v712, %v814
        %v816 = vpop.f32.mrb[0].mxu0
        %817 = vmatprep.mubr.f32.mxu0 0.0
        %818 = vmatmul.mubr.f32.gmra.mrb[0].mxu0 %v724
        %v819 = vpop.f32.mrb[0].mxu0
        %v820 = vadd.f32 %v712, %v819
        %v821 = vpop.f32.mrb[0].mxu0
        %822 = vmatprep.mubr.f32.mxu0 0.0
        %823 = vmatmul.mubr.f32.gmra.mrb[0].mxu0 %v727
        %v824 = vpop.f32.mrb[0].mxu0
        %v825 = vadd.f32 %v712, %v824
        %v826 = vpop.f32.mrb[0].mxu0
        %827 = vmatprep.mubr.f32.mxu0 0.0
        %828 = vmatmul.mubr.f32.gmra.mrb[0].mxu0 %v730
        %v829 = vpop.f32.mrb[0].mxu0
        %v830 = vadd.f32 %v712, %v829
        %v831 = vpop.f32.mrb[0].mxu0
        %832 = vmatprep.mubr.f32.mxu0 0.0
        %833 = vmatmul.mubr.f32.gmra.mrb[0].mxu0 %v733
        %v834 = vpop.f32.mrb[0].mxu0
        %v835 = vadd.f32 %v712, %v834
        %v836 = vpop.f32.mrb[0].mxu0
        %837 = vmatprep.mubr.f32.mxu0 0.0
        %838 = vmatmul.mubr.f32.gmra.mrb[0].mxu0 %v736
        %v839 = vpop.f32.mrb[0].mxu0
        %v840 = vadd.f32 %v712, %v839
        %v841 = vpop.f32.mrb[0].mxu0
        %842 = vdwg.mxu0
        %v843 = vmul.f32 %v805, 0.5
        %v844 = vmul.f32 %v810, 0.5
        %v845 = vmul.f32 %v815, 0.5
        %v846 = vmul.f32 %v820, 0.5
        %v847 = vmul.f32 %v825, 0.5
        %v848 = vmul.f32 %v830, 0.5
        %v849 = vmul.f32 %v835, 0.5
        %v850 = vmul.f32 %v840, 0.5
        %v851 = vmul.f32 %v805, 0.70710677
        %v852 = vmul.f32 %v810, 0.70710677
        %v853 = vmul.f32 %v815, 0.70710677
        %v854 = vmul.f32 %v820, 0.70710677
        %v855 = vmul.f32 %v825, 0.70710677
        %v856 = vmul.f32 %v830, 0.70710677
        %v857 = vmul.f32 %v835, 0.70710677
        %v858 = vmul.f32 %v840, 0.70710677
        %v859 = verf.f32.pop %v851
        %v860 = verf.f32.pop %v852
        %v861 = verf.f32.pop %v853
        %v862 = verf.f32.pop %v854
        %v863 = verf.f32.pop %v855
        %v864 = verf.f32.pop %v856
        %v865 = verf.f32.pop %v857
        %v866 = verf.f32.pop %v858
        %v867 = vadd.f32 %v859, 1.0
        %v868 = vadd.f32 %v860, 1.0
        %v869 = vadd.f32 %v861, 1.0
        %v870 = vadd.f32 %v862, 1.0
        %v871 = vadd.f32 %v863, 1.0
        %v872 = vadd.f32 %v864, 1.0
        %v873 = vadd.f32 %v865, 1.0
        %v874 = vadd.f32 %v866, 1.0
        %v875 = vmul.f32 %v843, %v867
        %v876 = vmul.f32 %v844, %v868
        %v877 = vmul.f32 %v845, %v869
        %v878 = vmul.f32 %v846, %v870
        %v879 = vmul.f32 %v847, %v871
        %v880 = vmul.f32 %v848, %v872
        %v881 = vmul.f32 %v849, %v873
        %v882 = vmul.f32 %v850, %v874
        %v883 = vld [vmem:[%s485] sm:$0x1]
        %v884 = vld [vmem:[%s485 + $0x1] sm:$0x1]
        %v885 = vld [vmem:[%s485 + $0x2] sm:$0x1]
        %v886 = vld [vmem:[%s485 + $0x3] sm:$0x1]
        %889 = vrot.lane.b32.xlu0 %v875, 112
        %v890 = vpop.permute.xlu0 %889
        %891 = vrot.lane.b32.xlu0 %v876, 112
        %v892 = vpop.permute.xlu0 %891
        %vm895 = vcmask 130048
        %v897 = vsel %vm895, %v883, 0
        %899 = vmatprep.subr.mxu0 0.0
        %900 = vmatpush1.msra.mxu0 %v890
        %901 = vmatprep.subr.mxu0 0.0
        %902 = vmatpush1.msra.mxu0 %v892
        %903 = vmatprep.subr.mxu0 0.0
        %904 = vmatpush1.msra.mxu0 0.0
        %905 = vmatprep.subr.mxu0 0.0
        %906 = vmatpush1.msra.mxu0 0.0
        %907 = vmatprep.subr.mxu0 0.0
        %908 = vmatpush1.msra.mxu0 0.0
        %909 = vmatprep.subr.mxu0 0.0
        %910 = vmatpush1.msra.mxu0 0.0
        %911 = vmatprep.subr.mxu0 0.0
        %912 = vmatpush1.msra.mxu0 0.0
        %913 = vmatprep.subr.mxu0 0.0
        %914 = vmatpush1.msra.mxu0 0.0
        %915 = vmatprep.subr.mxu0 0.0
        %916 = vmatpush1.msra.mxu0 0.0
        %917 = vmatprep.subr.mxu0 0.0
        %918 = vmatpush1.msra.mxu0 0.0
        %919 = vmatprep.subr.mxu0 0.0
        %920 = vmatpush1.msra.mxu0 0.0
        %921 = vmatprep.subr.mxu0 0.0
        %922 = vmatpush1.msra.mxu0 0.0
        %923 = vmatprep.subr.mxu0 0.0
        %924 = vmatpush1.msra.mxu0 0.0
        %925 = vmatprep.subr.mxu0 0.0
        %926 = vmatpush1.msra.mxu0 0.0
        %927 = vmatprep.subr.mxu0 0.0
        %928 = vmatpush1.msra.mxu0 0.0
        %929 = vmatprep.subr.mxu0 0.0
        %930 = vmatpush1.msra.mxu0 0.0
        %931 = vmatprep.subr.mxu0 0.0
        %932 = vmatpush1.msra.mxu0 0.0
        %933 = vmatprep.subr.mxu0 0.0
        %934 = vmatpush1.msra.mxu0 0.0
        %935 = vmatprep.subr.mxu0 0.0
        %936 = vmatpush1.msra.mxu0 0.0
        %937 = vmatprep.subr.mxu0 0.0
        %938 = vmatpush1.msra.mxu0 0.0
        %939 = vmatprep.subr.mxu0 0.0
        %940 = vmatpush1.msra.mxu0 0.0
        %941 = vmatprep.subr.mxu0 0.0
        %942 = vmatpush1.msra.mxu0 0.0
        %943 = vmatprep.subr.mxu0 0.0
        %944 = vmatpush1.msra.mxu0 0.0
        %945 = vmatprep.subr.mxu0 0.0
        %946 = vmatpush1.msra.mxu0 0.0
        %947 = vmatprep.subr.mxu0 0.0
        %948 = vmatpush1.msra.mxu0 0.0
        %949 = vmatprep.subr.mxu0 0.0
        %950 = vmatpush1.msra.mxu0 0.0
        %951 = vmatprep.subr.mxu0 0.0
        %952 = vmatpush1.msra.mxu0 0.0
        %953 = vmatprep.subr.mxu0 0.0
        %954 = vmatpush1.msra.mxu0 0.0
        %955 = vmatprep.subr.mxu0 0.0
        %956 = vmatpush1.msra.mxu0 0.0
        %957 = vmatprep.subr.mxu0 0.0
        %958 = vmatpush1.msra.mxu0 0.0
        %959 = vmatprep.subr.mxu0 0.0
        %960 = vmatpush1.msra.mxu0 0.0
        %961 = vmatprep.subr.mxu0 0.0
        %962 = vmatpush1.msra.mxu0 0.0
        %963 = vmatprep.mubr.f32.mxu0 0.0
        %964 = vmatmul.mubr.f32.gmra.mrb[0].mxu0 %v897
        %v965 = vpop.f32.mrb[0].mxu0
        %v966 = vadd.f32 0.0, %v965
        %v967 = vpop.f32.mrb[0].mxu0
        %968 = vdwg.mxu0
        %971 = vrot.lane.b32.xlu0 %v877, 112
        %v972 = vpop.permute.xlu0 %971
        %973 = vrot.lane.b32.xlu0 %v878, 112
        %v974 = vpop.permute.xlu0 %973
        %v978 = vsel %vm895, %v884, 0
        %980 = vmatprep.subr.mxu0 0.0
        %981 = vmatpush1.msra.mxu0 %v972
        %982 = vmatprep.subr.mxu0 0.0
        %983 = vmatpush1.msra.mxu0 %v974
        %984 = vmatprep.subr.mxu0 0.0
        %985 = vmatpush1.msra.mxu0 0.0
        %986 = vmatprep.subr.mxu0 0.0
        %987 = vmatpush1.msra.mxu0 0.0
        %988 = vmatprep.subr.mxu0 0.0
        %989 = vmatpush1.msra.mxu0 0.0
        %990 = vmatprep.subr.mxu0 0.0
        %991 = vmatpush1.msra.mxu0 0.0
        %992 = vmatprep.subr.mxu0 0.0
        %993 = vmatpush1.msra.mxu0 0.0
        %994 = vmatprep.subr.mxu0 0.0
        %995 = vmatpush1.msra.mxu0 0.0
        %996 = vmatprep.subr.mxu0 0.0
        %997 = vmatpush1.msra.mxu0 0.0
        %998 = vmatprep.subr.mxu0 0.0
        %999 = vmatpush1.msra.mxu0 0.0
        %1000 = vmatprep.subr.mxu0 0.0
        %1001 = vmatpush1.msra.mxu0 0.0
        %1002 = vmatprep.subr.mxu0 0.0
        %1003 = vmatpush1.msra.mxu0 0.0
        %1004 = vmatprep.subr.mxu0 0.0
        %1005 = vmatpush1.msra.mxu0 0.0
        %1006 = vmatprep.subr.mxu0 0.0
        %1007 = vmatpush1.msra.mxu0 0.0
        %1008 = vmatprep.subr.mxu0 0.0
        %1009 = vmatpush1.msra.mxu0 0.0
        %1010 = vmatprep.subr.mxu0 0.0
        %1011 = vmatpush1.msra.mxu0 0.0
        %1012 = vmatprep.subr.mxu0 0.0
        %1013 = vmatpush1.msra.mxu0 0.0
        %1014 = vmatprep.subr.mxu0 0.0
        %1015 = vmatpush1.msra.mxu0 0.0
        %1016 = vmatprep.subr.mxu0 0.0
        %1017 = vmatpush1.msra.mxu0 0.0
        %1018 = vmatprep.subr.mxu0 0.0
        %1019 = vmatpush1.msra.mxu0 0.0
        %1020 = vmatprep.subr.mxu0 0.0
        %1021 = vmatpush1.msra.mxu0 0.0
        %1022 = vmatprep.subr.mxu0 0.0
        %1023 = vmatpush1.msra.mxu0 0.0
        %1024 = vmatprep.subr.mxu0 0.0
        %1025 = vmatpush1.msra.mxu0 0.0
        %1026 = vmatprep.subr.mxu0 0.0
        %1027 = vmatpush1.msra.mxu0 0.0
        %1028 = vmatprep.subr.mxu0 0.0
        %1029 = vmatpush1.msra.mxu0 0.0
        %1030 = vmatprep.subr.mxu0 0.0
        %1031 = vmatpush1.msra.mxu0 0.0
        %1032 = vmatprep.subr.mxu0 0.0
        %1033 = vmatpush1.msra.mxu0 0.0
        %1034 = vmatprep.subr.mxu0 0.0
        %1035 = vmatpush1.msra.mxu0 0.0
        %1036 = vmatprep.subr.mxu0 0.0
        %1037 = vmatpush1.msra.mxu0 0.0
        %1038 = vmatprep.subr.mxu0 0.0
        %1039 = vmatpush1.msra.mxu0 0.0
        %1040 = vmatprep.subr.mxu0 0.0
        %1041 = vmatpush1.msra.mxu0 0.0
        %1042 = vmatprep.subr.mxu0 0.0
        %1043 = vmatpush1.msra.mxu0 0.0
        %1044 = vmatprep.mubr.f32.mxu0 0.0
        %1045 = vmatmul.mubr.f32.gmra.mrb[0].mxu0 %v978
        %v1046 = vpop.f32.mrb[0].mxu0
        %v1047 = vadd.f32 0.0, %v1046
        %v1048 = vpop.f32.mrb[0].mxu0
        %1049 = vdwg.mxu0
        %1052 = vrot.lane.b32.xlu0 %v879, 112
        %v1053 = vpop.permute.xlu0 %1052
        %1054 = vrot.lane.b32.xlu0 %v880, 112
        %v1055 = vpop.permute.xlu0 %1054
        %v1059 = vsel %vm895, %v885, 0
        %1061 = vmatprep.subr.mxu0 0.0
        %1062 = vmatpush1.msra.mxu0 %v1053
        %1063 = vmatprep.subr.mxu0 0.0
        %1064 = vmatpush1.msra.mxu0 %v1055
        %1065 = vmatprep.subr.mxu0 0.0
        %1066 = vmatpush1.msra.mxu0 0.0
        %1067 = vmatprep.subr.mxu0 0.0
        %1068 = vmatpush1.msra.mxu0 0.0
        %1069 = vmatprep.subr.mxu0 0.0
        %1070 = vmatpush1.msra.mxu0 0.0
        %1071 = vmatprep.subr.mxu0 0.0
        %1072 = vmatpush1.msra.mxu0 0.0
        %1073 = vmatprep.subr.mxu0 0.0
        %1074 = vmatpush1.msra.mxu0 0.0
        %1075 = vmatprep.subr.mxu0 0.0
        %1076 = vmatpush1.msra.mxu0 0.0
        %1077 = vmatprep.subr.mxu0 0.0
        %1078 = vmatpush1.msra.mxu0 0.0
        %1079 = vmatprep.subr.mxu0 0.0
        %1080 = vmatpush1.msra.mxu0 0.0
        %1081 = vmatprep.subr.mxu0 0.0
        %1082 = vmatpush1.msra.mxu0 0.0
        %1083 = vmatprep.subr.mxu0 0.0
        %1084 = vmatpush1.msra.mxu0 0.0
        %1085 = vmatprep.subr.mxu0 0.0
        %1086 = vmatpush1.msra.mxu0 0.0
        %1087 = vmatprep.subr.mxu0 0.0
        %1088 = vmatpush1.msra.mxu0 0.0
        %1089 = vmatprep.subr.mxu0 0.0
        %1090 = vmatpush1.msra.mxu0 0.0
        %1091 = vmatprep.subr.mxu0 0.0
        %1092 = vmatpush1.msra.mxu0 0.0
        %1093 = vmatprep.subr.mxu0 0.0
        %1094 = vmatpush1.msra.mxu0 0.0
        %1095 = vmatprep.subr.mxu0 0.0
        %1096 = vmatpush1.msra.mxu0 0.0
        %1097 = vmatprep.subr.mxu0 0.0
        %1098 = vmatpush1.msra.mxu0 0.0
        %1099 = vmatprep.subr.mxu0 0.0
        %1100 = vmatpush1.msra.mxu0 0.0
        %1101 = vmatprep.subr.mxu0 0.0
        %1102 = vmatpush1.msra.mxu0 0.0
        %1103 = vmatprep.subr.mxu0 0.0
        %1104 = vmatpush1.msra.mxu0 0.0
        %1105 = vmatprep.subr.mxu0 0.0
        %1106 = vmatpush1.msra.mxu0 0.0
        %1107 = vmatprep.subr.mxu0 0.0
        %1108 = vmatpush1.msra.mxu0 0.0
        %1109 = vmatprep.subr.mxu0 0.0
        %1110 = vmatpush1.msra.mxu0 0.0
        %1111 = vmatprep.subr.mxu0 0.0
        %1112 = vmatpush1.msra.mxu0 0.0
        %1113 = vmatprep.subr.mxu0 0.0
        %1114 = vmatpush1.msra.mxu0 0.0
        %1115 = vmatprep.subr.mxu0 0.0
        %1116 = vmatpush1.msra.mxu0 0.0
        %1117 = vmatprep.subr.mxu0 0.0
        %1118 = vmatpush1.msra.mxu0 0.0
        %1119 = vmatprep.subr.mxu0 0.0
        %1120 = vmatpush1.msra.mxu0 0.0
        %1121 = vmatprep.subr.mxu0 0.0
        %1122 = vmatpush1.msra.mxu0 0.0
        %1123 = vmatprep.subr.mxu0 0.0
        %1124 = vmatpush1.msra.mxu0 0.0
        %1125 = vmatprep.mubr.f32.mxu0 0.0
        %1126 = vmatmul.mubr.f32.gmra.mrb[0].mxu0 %v1059
        %v1127 = vpop.f32.mrb[0].mxu0
        %v1128 = vadd.f32 0.0, %v1127
        %v1129 = vpop.f32.mrb[0].mxu0
        %1130 = vdwg.mxu0
        %1133 = vrot.lane.b32.xlu0 %v881, 112
        %v1134 = vpop.permute.xlu0 %1133
        %1135 = vrot.lane.b32.xlu0 %v882, 112
        %v1136 = vpop.permute.xlu0 %1135
        %v1140 = vsel %vm895, %v886, 0
        %1142 = vmatprep.subr.mxu0 0.0
        %1143 = vmatpush1.msra.mxu0 %v1134
        %1144 = vmatprep.subr.mxu0 0.0
        %1145 = vmatpush1.msra.mxu0 %v1136
        %1146 = vmatprep.subr.mxu0 0.0
        %1147 = vmatpush1.msra.mxu0 0.0
        %1148 = vmatprep.subr.mxu0 0.0
        %1149 = vmatpush1.msra.mxu0 0.0
        %1150 = vmatprep.subr.mxu0 0.0
        %1151 = vmatpush1.msra.mxu0 0.0
        %1152 = vmatprep.subr.mxu0 0.0
        %1153 = vmatpush1.msra.mxu0 0.0
        %1154 = vmatprep.subr.mxu0 0.0
        %1155 = vmatpush1.msra.mxu0 0.0
        %1156 = vmatprep.subr.mxu0 0.0
        %1157 = vmatpush1.msra.mxu0 0.0
        %1158 = vmatprep.subr.mxu0 0.0
        %1159 = vmatpush1.msra.mxu0 0.0
        %1160 = vmatprep.subr.mxu0 0.0
        %1161 = vmatpush1.msra.mxu0 0.0
        %1162 = vmatprep.subr.mxu0 0.0
        %1163 = vmatpush1.msra.mxu0 0.0
        %1164 = vmatprep.subr.mxu0 0.0
        %1165 = vmatpush1.msra.mxu0 0.0
        %1166 = vmatprep.subr.mxu0 0.0
        %1167 = vmatpush1.msra.mxu0 0.0
        %1168 = vmatprep.subr.mxu0 0.0
        %1169 = vmatpush1.msra.mxu0 0.0
        %1170 = vmatprep.subr.mxu0 0.0
        %1171 = vmatpush1.msra.mxu0 0.0
        %1172 = vmatprep.subr.mxu0 0.0
        %1173 = vmatpush1.msra.mxu0 0.0
        %1174 = vmatprep.subr.mxu0 0.0
        %1175 = vmatpush1.msra.mxu0 0.0
        %1176 = vmatprep.subr.mxu0 0.0
        %1177 = vmatpush1.msra.mxu0 0.0
        %1178 = vmatprep.subr.mxu0 0.0
        %1179 = vmatpush1.msra.mxu0 0.0
        %1180 = vmatprep.subr.mxu0 0.0
        %1181 = vmatpush1.msra.mxu0 0.0
        %1182 = vmatprep.subr.mxu0 0.0
        %1183 = vmatpush1.msra.mxu0 0.0
        %1184 = vmatprep.subr.mxu0 0.0
        %1185 = vmatpush1.msra.mxu0 0.0
        %1186 = vmatprep.subr.mxu0 0.0
        %1187 = vmatpush1.msra.mxu0 0.0
        %1188 = vmatprep.subr.mxu0 0.0
        %1189 = vmatpush1.msra.mxu0 0.0
        %1190 = vmatprep.subr.mxu0 0.0
        %1191 = vmatpush1.msra.mxu0 0.0
        %1192 = vmatprep.subr.mxu0 0.0
        %1193 = vmatpush1.msra.mxu0 0.0
        %1194 = vmatprep.subr.mxu0 0.0
        %1195 = vmatpush1.msra.mxu0 0.0
        %1196 = vmatprep.subr.mxu0 0.0
        %1197 = vmatpush1.msra.mxu0 0.0
        %1198 = vmatprep.subr.mxu0 0.0
        %1199 = vmatpush1.msra.mxu0 0.0
        %1200 = vmatprep.subr.mxu0 0.0
        %1201 = vmatpush1.msra.mxu0 0.0
        %1202 = vmatprep.subr.mxu0 0.0
        %1203 = vmatpush1.msra.mxu0 0.0
        %1204 = vmatprep.subr.mxu0 0.0
        %1205 = vmatpush1.msra.mxu0 0.0
        %1206 = vmatprep.mubr.f32.mxu0 0.0
        %1207 = vmatmul.mubr.f32.gmra.mrb[0].mxu0 %v1140
        %v1208 = vpop.f32.mrb[0].mxu0
        %v1209 = vadd.f32 0.0, %v1208
        %v1210 = vpop.f32.mrb[0].mxu0
        %1211 = vdwg.mxu0
        %vm1212 = vcmask 122880
        %v1213 = vsel %vm1212, %v883, 0.0
        %1214 = vadd.xlane.f32.xlu0 %v1213
        %v1215 = vpop.xlane.xlu0 %1214
        %v1216 = vsel %vm1212, %v884, 0.0
        %1217 = vadd.xlane.f32.xlu0 %v1216
        %v1218 = vpop.xlane.xlu0 %1217
        %v1219 = vsel %vm1212, %v885, 0.0
        %1220 = vadd.xlane.f32.xlu0 %v1219
        %v1221 = vpop.xlane.xlu0 %1220
        %v1222 = vsel %vm1212, %v886, 0.0
        %1223 = vadd.xlane.f32.xlu0 %v1222
        %v1224 = vpop.xlane.xlu0 %1223
        %v1225 = vrcp.pop %v1215
        %v1226 = vrcp.pop %v1218
        %v1227 = vrcp.pop %v1221
        %v1228 = vrcp.pop %v1224
        %v1229 = vlaneseq
        %v1230 = vshrl.u32 %v1229, 7
        %v1231 = vsub.s32 0, %v1230
        %v1232 = vrot.slane %v1225, %v1231
        %v1233 = vlaneseq
        %v1234 = vshrl.u32 %v1233, 7
        %v1235 = vsub.s32 0, %v1234
        %v1236 = vrot.slane %v1226, %v1235
        %v1237 = vlaneseq
        %v1238 = vshrl.u32 %v1237, 7
        %v1239 = vsub.s32 0, %v1238
        %v1240 = vrot.slane %v1227, %v1239
        %v1241 = vlaneseq
        %v1242 = vshrl.u32 %v1241, 7
        %v1243 = vsub.s32 0, %v1242
        %v1244 = vrot.slane %v1228, %v1243
        %v1245 = vmul.f32 %v966, %v1232
        %v1246 = vmul.f32 %v1047, %v1236
        %v1247 = vmul.f32 %v1128, %v1240
        %v1248 = vmul.f32 %v1209, %v1244
        %v1249 = vld [vmem:[%s6] sm:$0xff]
        %v1250 = vld [vmem:[%s6 + $0x8] sm:$0xff]
        %v1251 = vsel %vm895, %v875, 0
        %v1253 = vsel %vm895, %v876, 0
        %v1255 = vsel %vm895, %v877, 0
        %v1257 = vsel %vm895, %v878, 0
        %v1259 = vsel %vm895, %v879, 0
        %v1261 = vsel %vm895, %v880, 0
        %v1263 = vsel %vm895, %v881, 0
        %v1265 = vsel %vm895, %v882, 0
        %1267 = vmatprep.subr.mxu0 0.0
        %1268 = vmatpush1.msra.mxu0 %v1249
        %1269 = vmatprep.subr.mxu0 0.0
        %1270 = vmatpush1.msra.mxu0 %v1250
        %1271 = vmatprep.subr.mxu0 0.0
        %1272 = vmatpush1.msra.mxu0 0.0
        %1273 = vmatprep.subr.mxu0 0.0
        %1274 = vmatpush1.msra.mxu0 0.0
        %1275 = vmatprep.subr.mxu0 0.0
        %1276 = vmatpush1.msra.mxu0 0.0
        %1277 = vmatprep.subr.mxu0 0.0
        %1278 = vmatpush1.msra.mxu0 0.0
        %1279 = vmatprep.subr.mxu0 0.0
        %1280 = vmatpush1.msra.mxu0 0.0
        %1281 = vmatprep.subr.mxu0 0.0
        %1282 = vmatpush1.msra.mxu0 0.0
        %1283 = vmatprep.subr.mxu0 0.0
        %1284 = vmatpush1.msra.mxu0 0.0
        %1285 = vmatprep.subr.mxu0 0.0
        %1286 = vmatpush1.msra.mxu0 0.0
        %1287 = vmatprep.subr.mxu0 0.0
        %1288 = vmatpush1.msra.mxu0 0.0
        %1289 = vmatprep.subr.mxu0 0.0
        %1290 = vmatpush1.msra.mxu0 0.0
        %1291 = vmatprep.subr.mxu0 0.0
        %1292 = vmatpush1.msra.mxu0 0.0
        %1293 = vmatprep.subr.mxu0 0.0
        %1294 = vmatpush1.msra.mxu0 0.0
        %1295 = vmatprep.subr.mxu0 0.0
        %1296 = vmatpush1.msra.mxu0 0.0
        %1297 = vmatprep.subr.mxu0 0.0
        %1298 = vmatpush1.msra.mxu0 0.0
        %1299 = vmatprep.subr.mxu0 0.0
        %1300 = vmatpush1.msra.mxu0 0.0
        %1301 = vmatprep.subr.mxu0 0.0
        %1302 = vmatpush1.msra.mxu0 0.0
        %1303 = vmatprep.subr.mxu0 0.0
        %1304 = vmatpush1.msra.mxu0 0.0
        %1305 = vmatprep.subr.mxu0 0.0
        %1306 = vmatpush1.msra.mxu0 0.0
        %1307 = vmatprep.subr.mxu0 0.0
        %1308 = vmatpush1.msra.mxu0 0.0
        %1309 = vmatprep.subr.mxu0 0.0
        %1310 = vmatpush1.msra.mxu0 0.0
        %1311 = vmatprep.subr.mxu0 0.0
        %1312 = vmatpush1.msra.mxu0 0.0
        %1313 = vmatprep.subr.mxu0 0.0
        %1314 = vmatpush1.msra.mxu0 0.0
        %1315 = vmatprep.subr.mxu0 0.0
        %1316 = vmatpush1.msra.mxu0 0.0
        %1317 = vmatprep.subr.mxu0 0.0
        %1318 = vmatpush1.msra.mxu0 0.0
        %1319 = vmatprep.subr.mxu0 0.0
        %1320 = vmatpush1.msra.mxu0 0.0
        %1321 = vmatprep.subr.mxu0 0.0
        %1322 = vmatpush1.msra.mxu0 0.0
        %1323 = vmatprep.subr.mxu0 0.0
        %1324 = vmatpush1.msra.mxu0 0.0
        %1325 = vmatprep.subr.mxu0 0.0
        %1326 = vmatpush1.msra.mxu0 0.0
        %1327 = vmatprep.subr.mxu0 0.0
        %1328 = vmatpush1.msra.mxu0 0.0
        %1329 = vmatprep.subr.mxu0 0.0
        %1330 = vmatpush1.msra.mxu0 0.0
        %1331 = vmatprep.mubr.f32.mxu0 0.0
        %1332 = vmatmul.mubr.f32.gmra.mrb[0].mxu0 %v1251
        %v1333 = vpop.f32.mrb[0].mxu0
        %v1334 = vadd.f32 0.0, %v1333
        %v1335 = vpop.f32.mrb[0].mxu0
        %1336 = vmatprep.mubr.f32.mxu0 0.0
        %1337 = vmatmul.mubr.f32.gmra.mrb[0].mxu0 %v1253
        %v1338 = vpop.f32.mrb[0].mxu0
        %v1339 = vadd.f32 0.0, %v1338
        %v1340 = vpop.f32.mrb[0].mxu0
        %1341 = vmatprep.mubr.f32.mxu0 0.0
        %1342 = vmatmul.mubr.f32.gmra.mrb[0].mxu0 %v1255
        %v1343 = vpop.f32.mrb[0].mxu0
        %v1344 = vadd.f32 0.0, %v1343
        %v1345 = vpop.f32.mrb[0].mxu0
        %1346 = vmatprep.mubr.f32.mxu0 0.0
        %1347 = vmatmul.mubr.f32.gmra.mrb[0].mxu0 %v1257
        %v1348 = vpop.f32.mrb[0].mxu0
        %v1349 = vadd.f32 0.0, %v1348
        %v1350 = vpop.f32.mrb[0].mxu0
        %1351 = vmatprep.mubr.f32.mxu0 0.0
        %1352 = vmatmul.mubr.f32.gmra.mrb[0].mxu0 %v1259
        %v1353 = vpop.f32.mrb[0].mxu0
        %v1354 = vadd.f32 0.0, %v1353
        %v1355 = vpop.f32.mrb[0].mxu0
        %1356 = vmatprep.mubr.f32.mxu0 0.0
        %1357 = vmatmul.mubr.f32.gmra.mrb[0].mxu0 %v1261
        %v1358 = vpop.f32.mrb[0].mxu0
        %v1359 = vadd.f32 0.0, %v1358
        %v1360 = vpop.f32.mrb[0].mxu0
        %1361 = vmatprep.mubr.f32.mxu0 0.0
        %1362 = vmatmul.mubr.f32.gmra.mrb[0].mxu0 %v1263
        %v1363 = vpop.f32.mrb[0].mxu0
        %v1364 = vadd.f32 0.0, %v1363
        %v1365 = vpop.f32.mrb[0].mxu0
        %1366 = vmatprep.mubr.f32.mxu0 0.0
        %1367 = vmatmul.mubr.f32.gmra.mrb[0].mxu0 %v1265
        %v1368 = vpop.f32.mrb[0].mxu0
        %v1369 = vadd.f32 0.0, %v1368
        %v1370 = vpop.f32.mrb[0].mxu0
        %1371 = vdwg.mxu0
        %v1372 = vld [vmem:[#allocation10] sm:$0xff]
        %v1373 = vld [vmem:[#allocation10 + $0x8] sm:$0xff]
        %v1378 = vrot.slane %v1246, 7
        %vm1379 = vcmask 1041409
        %v1380 = vsel %vm1379, %v1378, %v1245
        %v1381 = vrot.slane %v1247, 6
        %vm1382 = vcmask 1042434
        %v1383 = vsel %vm1382, %v1381, %v1380
        %v1384 = vrot.slane %v1248, 5
        %vm1385 = vcmask 1043459
        %v1386 = vsel %vm1385, %v1384, %v1383
        %v1387 = vsel %vm895, %v1386, 0
        %1389 = vmatprep.subr.mxu0 0.0
        %1390 = vmatpush1.msra.mxu0 %v1372
        %1391 = vmatprep.subr.mxu0 0.0
        %1392 = vmatpush1.msra.mxu0 %v1373
        %1393 = vmatprep.subr.mxu0 0.0
        %1394 = vmatpush1.msra.mxu0 0.0
        %1395 = vmatprep.subr.mxu0 0.0
        %1396 = vmatpush1.msra.mxu0 0.0
        %1397 = vmatprep.subr.mxu0 0.0
        %1398 = vmatpush1.msra.mxu0 0.0
        %1399 = vmatprep.subr.mxu0 0.0
        %1400 = vmatpush1.msra.mxu0 0.0
        %1401 = vmatprep.subr.mxu0 0.0
        %1402 = vmatpush1.msra.mxu0 0.0
        %1403 = vmatprep.subr.mxu0 0.0
        %1404 = vmatpush1.msra.mxu0 0.0
        %1405 = vmatprep.subr.mxu0 0.0
        %1406 = vmatpush1.msra.mxu0 0.0
        %1407 = vmatprep.subr.mxu0 0.0
        %1408 = vmatpush1.msra.mxu0 0.0
        %1409 = vmatprep.subr.mxu0 0.0
        %1410 = vmatpush1.msra.mxu0 0.0
        %1411 = vmatprep.subr.mxu0 0.0
        %1412 = vmatpush1.msra.mxu0 0.0
        %1413 = vmatprep.subr.mxu0 0.0
        %1414 = vmatpush1.msra.mxu0 0.0
        %1415 = vmatprep.subr.mxu0 0.0
        %1416 = vmatpush1.msra.mxu0 0.0
        %1417 = vmatprep.subr.mxu0 0.0
        %1418 = vmatpush1.msra.mxu0 0.0
        %1419 = vmatprep.subr.mxu0 0.0
        %1420 = vmatpush1.msra.mxu0 0.0
        %1421 = vmatprep.subr.mxu0 0.0
        %1422 = vmatpush1.msra.mxu0 0.0
        %1423 = vmatprep.subr.mxu0 0.0
        %1424 = vmatpush1.msra.mxu0 0.0
        %1425 = vmatprep.subr.mxu0 0.0
        %1426 = vmatpush1.msra.mxu0 0.0
        %1427 = vmatprep.subr.mxu0 0.0
        %1428 = vmatpush1.msra.mxu0 0.0
        %1429 = vmatprep.subr.mxu0 0.0
        %1430 = vmatpush1.msra.mxu0 0.0
        %1431 = vmatprep.subr.mxu0 0.0
        %1432 = vmatpush1.msra.mxu0 0.0
        %1433 = vmatprep.subr.mxu0 0.0
        %1434 = vmatpush1.msra.mxu0 0.0
        %1435 = vmatprep.subr.mxu0 0.0
        %1436 = vmatpush1.msra.mxu0 0.0
        %1437 = vmatprep.subr.mxu0 0.0
        %1438 = vmatpush1.msra.mxu0 0.0
        %1439 = vmatprep.subr.mxu0 0.0
        %1440 = vmatpush1.msra.mxu0 0.0
        %1441 = vmatprep.subr.mxu0 0.0
        %1442 = vmatpush1.msra.mxu0 0.0
        %1443 = vmatprep.subr.mxu0 0.0
        %1444 = vmatpush1.msra.mxu0 0.0
        %1445 = vmatprep.subr.mxu0 0.0
        %1446 = vmatpush1.msra.mxu0 0.0
        %1447 = vmatprep.subr.mxu0 0.0
        %1448 = vmatpush1.msra.mxu0 0.0
        %1449 = vmatprep.subr.mxu0 0.0
        %1450 = vmatpush1.msra.mxu0 0.0
        %1451 = vmatprep.subr.mxu0 0.0
        %1452 = vmatpush1.msra.mxu0 0.0
        %1453 = vmatprep.mubr.f32.mxu0 0.0
        %1454 = vmatmul.mubr.f32.gmra.mrb[0].mxu0 %v1387
        %v1455 = vpop.f32.mrb[0].mxu0
        %v1456 = vadd.f32 0.0, %v1455
        %v1457 = vpop.f32.mrb[0].mxu0
        %1458 = vdwg.mxu0
        %v1461 = vunpack.c.l.s4 1966171168
        %v1462 = vunpack.c.0.s8 %v1461
        %v1463 = vlaneseq
        %v1464 = vshrl.u32 %v1463, 7
        %v1465 = vsub.s32 %v1462, %v1464
        %v1466 = vrot.slane %v1456, %v1465
        %v1467 = vcombine.high %v1466, %v1466
        %v1469 = vunpack.c.l.s4 1966171168
        %v1470 = vunpack.c.0.s8 %v1469
        %v1471 = vlaneseq
        %v1472 = vshrl.u32 %v1471, 7
        %v1473 = vsub.s32 %v1470, %v1472
        %v1474 = vrot.slane %v1466, %v1473
        %v1476 = vunpack.c.l.s4 1966171168
        %v1477 = vunpack.c.0.s8 %v1476
        %v1478 = vlaneseq
        %v1479 = vshrl.u32 %v1478, 7
        %v1480 = vsub.s32 %v1477, %v1479
        %v1481 = vrot.slane %v1467, %v1480
        %v1482 = vcombine.high %v1474, %v1474
        %v1483 = vcombine.high %v1481, %v1481
        %v1484 = vlaneseq
        %v1485 = vshrl.u32 %v1484, 7
        %v1486 = vsub.s32 0, %v1485
        %v1487 = vrot.slane %v1474, %v1486
        %v1488 = vlaneseq
        %v1489 = vshrl.u32 %v1488, 7
        %v1490 = vsub.s32 0, %v1489
        %v1491 = vrot.slane %v1481, %v1490
        %v1492 = vlaneseq
        %v1493 = vshrl.u32 %v1492, 7
        %v1494 = vsub.s32 0, %v1493
        %v1495 = vrot.slane %v1482, %v1494
        %v1496 = vlaneseq
        %v1497 = vshrl.u32 %v1496, 7
        %v1498 = vsub.s32 0, %v1497
        %v1499 = vrot.slane %v1483, %v1498
        %v1504 = vadd.f32 %v1334, %v1487
        %v1505 = vadd.f32 %v1339, %v1487
        %v1506 = vadd.f32 %v1344, %v1491
        %v1507 = vadd.f32 %v1349, %v1491
        %v1508 = vadd.f32 %v1354, %v1495
        %v1509 = vadd.f32 %v1359, %v1495
        %v1510 = vadd.f32 %v1364, %v1499
        %v1511 = vadd.f32 %v1369, %v1499
        %v1512 = vld [vmem:[%s8] sm:$0x1]
        %v1514 = vlaneseq
        %v1515 = vshrl.u32 %v1514, 7
        %v1516 = vsub.s32 0, %v1515
        %v1517 = vrot.slane %v1512, %v1516
        %v1519 = vadd.f32 %v1504, %v1517
        %v1520 = vadd.f32 %v1505, %v1517
        %v1521 = vadd.f32 %v1506, %v1517
        %v1522 = vadd.f32 %v1507, %v1517
        %v1523 = vadd.f32 %v1508, %v1517
        %v1524 = vadd.f32 %v1509, %v1517
        %v1525 = vadd.f32 %v1510, %v1517
        %v1526 = vadd.f32 %v1511, %v1517
        %v1527 = vmul.f32 %v1519, 0.5
        %v1528 = vmul.f32 %v1520, 0.5
        %v1529 = vmul.f32 %v1521, 0.5
        %v1530 = vmul.f32 %v1522, 0.5
        %v1531 = vmul.f32 %v1523, 0.5
        %v1532 = vmul.f32 %v1524, 0.5
        %v1533 = vmul.f32 %v1525, 0.5
        %v1534 = vmul.f32 %v1526, 0.5
        %v1535 = vmul.f32 %v1519, 0.70710677
        %v1536 = vmul.f32 %v1520, 0.70710677
        %v1537 = vmul.f32 %v1521, 0.70710677
        %v1538 = vmul.f32 %v1522, 0.70710677
        %v1539 = vmul.f32 %v1523, 0.70710677
        %v1540 = vmul.f32 %v1524, 0.70710677
        %v1541 = vmul.f32 %v1525, 0.70710677
        %v1542 = vmul.f32 %v1526, 0.70710677
        %v1543 = verf.f32.pop %v1535
        %v1544 = verf.f32.pop %v1536
        %v1545 = verf.f32.pop %v1537
        %v1546 = verf.f32.pop %v1538
        %v1547 = verf.f32.pop %v1539
        %v1548 = verf.f32.pop %v1540
        %v1549 = verf.f32.pop %v1541
        %v1550 = verf.f32.pop %v1542
        %v1551 = vadd.f32 %v1543, 1.0
        %v1552 = vadd.f32 %v1544, 1.0
        %v1553 = vadd.f32 %v1545, 1.0
        %v1554 = vadd.f32 %v1546, 1.0
        %v1555 = vadd.f32 %v1547, 1.0
        %v1556 = vadd.f32 %v1548, 1.0
        %v1557 = vadd.f32 %v1549, 1.0
        %v1558 = vadd.f32 %v1550, 1.0
        %v1559 = vmul.f32 %v1527, %v1551
        %v1560 = vmul.f32 %v1528, %v1552
        %v1561 = vmul.f32 %v1529, %v1553
        %v1562 = vmul.f32 %v1530, %v1554
        %v1563 = vmul.f32 %v1531, %v1555
        %v1564 = vmul.f32 %v1532, %v1556
        %v1565 = vmul.f32 %v1533, %v1557
        %v1566 = vmul.f32 %v1534, %v1558
        %v1567 = vld [vmem:[%s9] sm:$0xff]
        %v1568 = vld [vmem:[%s9 + $0x8] sm:$0xff]
        %v1569 = vld [vmem:[%s10] sm:$0x1]
        %v1571 = vlaneseq
        %v1572 = vshrl.u32 %v1571, 7
        %v1573 = vsub.s32 0, %v1572
        %v1574 = vrot.slane %v1569, %v1573
        %v1577 = vsel %vm895, %v1559, 0
        %v1580 = vsel %vm895, %v1560, 0
        %v1583 = vsel %vm895, %v1561, 0
        %v1586 = vsel %vm895, %v1562, 0
        %v1589 = vsel %vm895, %v1563, 0
        %v1592 = vsel %vm895, %v1564, 0
        %v1595 = vsel %vm895, %v1565, 0
        %v1598 = vsel %vm895, %v1566, 0
        %1600 = vmatprep.subr.mxu0 0.0
        %1601 = vmatpush1.msra.mxu0 %v1567
        %1602 = vmatprep.subr.mxu0 0.0
        %1603 = vmatpush1.msra.mxu0 %v1568
        %1604 = vmatprep.subr.mxu0 0.0
        %1605 = vmatpush1.msra.mxu0 0.0
        %1606 = vmatprep.subr.mxu0 0.0
        %1607 = vmatpush1.msra.mxu0 0.0
        %1608 = vmatprep.subr.mxu0 0.0
        %1609 = vmatpush1.msra.mxu0 0.0
        %1610 = vmatprep.subr.mxu0 0.0
        %1611 = vmatpush1.msra.mxu0 0.0
        %1612 = vmatprep.subr.mxu0 0.0
        %1613 = vmatpush1.msra.mxu0 0.0
        %1614 = vmatprep.subr.mxu0 0.0
        %1615 = vmatpush1.msra.mxu0 0.0
        %1616 = vmatprep.subr.mxu0 0.0
        %1617 = vmatpush1.msra.mxu0 0.0
        %1618 = vmatprep.subr.mxu0 0.0
        %1619 = vmatpush1.msra.mxu0 0.0
        %1620 = vmatprep.subr.mxu0 0.0
        %1621 = vmatpush1.msra.mxu0 0.0
        %1622 = vmatprep.subr.mxu0 0.0
        %1623 = vmatpush1.msra.mxu0 0.0
        %1624 = vmatprep.subr.mxu0 0.0
        %1625 = vmatpush1.msra.mxu0 0.0
        %1626 = vmatprep.subr.mxu0 0.0
        %1627 = vmatpush1.msra.mxu0 0.0
        %1628 = vmatprep.subr.mxu0 0.0
        %1629 = vmatpush1.msra.mxu0 0.0
        %1630 = vmatprep.subr.mxu0 0.0
        %1631 = vmatpush1.msra.mxu0 0.0
        %1632 = vmatprep.subr.mxu0 0.0
        %1633 = vmatpush1.msra.mxu0 0.0
        %1634 = vmatprep.subr.mxu0 0.0
        %1635 = vmatpush1.msra.mxu0 0.0
        %1636 = vmatprep.subr.mxu0 0.0
        %1637 = vmatpush1.msra.mxu0 0.0
        %1638 = vmatprep.subr.mxu0 0.0
        %1639 = vmatpush1.msra.mxu0 0.0
        %1640 = vmatprep.subr.mxu0 0.0
        %1641 = vmatpush1.msra.mxu0 0.0
        %1642 = vmatprep.subr.mxu0 0.0
        %1643 = vmatpush1.msra.mxu0 0.0
        %1644 = vmatprep.subr.mxu0 0.0
        %1645 = vmatpush1.msra.mxu0 0.0
        %1646 = vmatprep.subr.mxu0 0.0
        %1647 = vmatpush1.msra.mxu0 0.0
        %1648 = vmatprep.subr.mxu0 0.0
        %1649 = vmatpush1.msra.mxu0 0.0
        %1650 = vmatprep.subr.mxu0 0.0
        %1651 = vmatpush1.msra.mxu0 0.0
        %1652 = vmatprep.subr.mxu0 0.0
        %1653 = vmatpush1.msra.mxu0 0.0
        %1654 = vmatprep.subr.mxu0 0.0
        %1655 = vmatpush1.msra.mxu0 0.0
        %1656 = vmatprep.subr.mxu0 0.0
        %1657 = vmatpush1.msra.mxu0 0.0
        %1658 = vmatprep.subr.mxu0 0.0
        %1659 = vmatpush1.msra.mxu0 0.0
        %1660 = vmatprep.subr.mxu0 0.0
        %1661 = vmatpush1.msra.mxu0 0.0
        %1662 = vmatprep.subr.mxu0 0.0
        %1663 = vmatpush1.msra.mxu0 0.0
        %1664 = vmatprep.mubr.f32.mxu0 0.0
        %1665 = vmatmul.mubr.f32.gmra.mrb[0].mxu0 %v1577
        %v1666 = vpop.f32.mrb[0].mxu0
        %v1667 = vadd.f32 %v1574, %v1666
        %v1668 = vpop.f32.mrb[0].mxu0
        %1669 = vmatprep.mubr.f32.mxu0 0.0
        %1670 = vmatmul.mubr.f32.gmra.mrb[0].mxu0 %v1580
        %v1671 = vpop.f32.mrb[0].mxu0
        %v1672 = vadd.f32 %v1574, %v1671
        %v1673 = vpop.f32.mrb[0].mxu0
        %1674 = vmatprep.mubr.f32.mxu0 0.0
        %1675 = vmatmul.mubr.f32.gmra.mrb[0].mxu0 %v1583
        %v1676 = vpop.f32.mrb[0].mxu0
        %v1677 = vadd.f32 %v1574, %v1676
        %v1678 = vpop.f32.mrb[0].mxu0
        %1679 = vmatprep.mubr.f32.mxu0 0.0
        %1680 = vmatmul.mubr.f32.gmra.mrb[0].mxu0 %v1586
        %v1681 = vpop.f32.mrb[0].mxu0
        %v1682 = vadd.f32 %v1574, %v1681
        %v1683 = vpop.f32.mrb[0].mxu0
        %1684 = vmatprep.mubr.f32.mxu0 0.0
        %1685 = vmatmul.mubr.f32.gmra.mrb[0].mxu0 %v1589
        %v1686 = vpop.f32.mrb[0].mxu0
        %v1687 = vadd.f32 %v1574, %v1686
        %v1688 = vpop.f32.mrb[0].mxu0
        %1689 = vmatprep.mubr.f32.mxu0 0.0
        %1690 = vmatmul.mubr.f32.gmra.mrb[0].mxu0 %v1592
        %v1691 = vpop.f32.mrb[0].mxu0
        %v1692 = vadd.f32 %v1574, %v1691
        %v1693 = vpop.f32.mrb[0].mxu0
        %1694 = vmatprep.mubr.f32.mxu0 0.0
        %1695 = vmatmul.mubr.f32.gmra.mrb[0].mxu0 %v1595
        %v1696 = vpop.f32.mrb[0].mxu0
        %v1697 = vadd.f32 %v1574, %v1696
        %v1698 = vpop.f32.mrb[0].mxu0
        %1699 = vmatprep.mubr.f32.mxu0 0.0
        %1700 = vmatmul.mubr.f32.gmra.mrb[0].mxu0 %v1598
        %v1701 = vpop.f32.mrb[0].mxu0
        %v1702 = vadd.f32 %v1574, %v1701
        %v1703 = vpop.f32.mrb[0].mxu0
        %1704 = vdwg.mxu0
        %v1705 = vmul.f32 %v1667, 0.5
        %v1706 = vmul.f32 %v1672, 0.5
        %v1707 = vmul.f32 %v1677, 0.5
        %v1708 = vmul.f32 %v1682, 0.5
        %v1709 = vmul.f32 %v1687, 0.5
        %v1710 = vmul.f32 %v1692, 0.5
        %v1711 = vmul.f32 %v1697, 0.5
        %v1712 = vmul.f32 %v1702, 0.5
        %v1713 = vmul.f32 %v1667, 0.70710677
        %v1714 = vmul.f32 %v1672, 0.70710677
        %v1715 = vmul.f32 %v1677, 0.70710677
        %v1716 = vmul.f32 %v1682, 0.70710677
        %v1717 = vmul.f32 %v1687, 0.70710677
        %v1718 = vmul.f32 %v1692, 0.70710677
        %v1719 = vmul.f32 %v1697, 0.70710677
        %v1720 = vmul.f32 %v1702, 0.70710677
        %v1721 = verf.f32.pop %v1713
        %v1722 = verf.f32.pop %v1714
        %v1723 = verf.f32.pop %v1715
        %v1724 = verf.f32.pop %v1716
        %v1725 = verf.f32.pop %v1717
        %v1726 = verf.f32.pop %v1718
        %v1727 = verf.f32.pop %v1719
        %v1728 = verf.f32.pop %v1720
        %v1729 = vadd.f32 %v1721, 1.0
        %v1730 = vadd.f32 %v1722, 1.0
        %v1731 = vadd.f32 %v1723, 1.0
        %v1732 = vadd.f32 %v1724, 1.0
        %v1733 = vadd.f32 %v1725, 1.0
        %v1734 = vadd.f32 %v1726, 1.0
        %v1735 = vadd.f32 %v1727, 1.0
        %v1736 = vadd.f32 %v1728, 1.0
        %v1737 = vmul.f32 %v1705, %v1729
        %v1738 = vmul.f32 %v1706, %v1730
        %v1739 = vmul.f32 %v1707, %v1731
        %v1740 = vmul.f32 %v1708, %v1732
        %v1741 = vmul.f32 %v1709, %v1733
        %v1742 = vmul.f32 %v1710, %v1734
        %v1743 = vmul.f32 %v1711, %v1735
        %v1744 = vmul.f32 %v1712, %v1736
        %v1745 = vld [vmem:[%s11] sm:$0xff]
        %v1746 = vld [vmem:[%s12] sm:$0x1]
        %v1748 = vlaneseq
        %v1749 = vshrl.u32 %v1748, 7
        %v1750 = vsub.s32 0, %v1749
        %v1751 = vrot.slane %v1746, %v1750
        %vm1753 = vcmask 64512
        %v1755 = vsel %vm1753, %v1737, 0
        %v1758 = vsel %vm1753, %v1738, 0
        %v1761 = vsel %vm1753, %v1739, 0
        %v1764 = vsel %vm1753, %v1740, 0
        %v1767 = vsel %vm1753, %v1741, 0
        %v1770 = vsel %vm1753, %v1742, 0
        %v1773 = vsel %vm1753, %v1743, 0
        %v1776 = vsel %vm1753, %v1744, 0
        %1778 = vmatprep.subr.mxu0 0.0
        %1779 = vmatpush1.msra.mxu0 %v1745
        %1780 = vmatprep.subr.mxu0 0.0
        %1781 = vmatpush1.msra.mxu0 0.0
        %1782 = vmatprep.subr.mxu0 0.0
        %1783 = vmatpush1.msra.mxu0 0.0
        %1784 = vmatprep.subr.mxu0 0.0
        %1785 = vmatpush1.msra.mxu0 0.0
        %1786 = vmatprep.subr.mxu0 0.0
        %1787 = vmatpush1.msra.mxu0 0.0
        %1788 = vmatprep.subr.mxu0 0.0
        %1789 = vmatpush1.msra.mxu0 0.0
        %1790 = vmatprep.subr.mxu0 0.0
        %1791 = vmatpush1.msra.mxu0 0.0
        %1792 = vmatprep.subr.mxu0 0.0
        %1793 = vmatpush1.msra.mxu0 0.0
        %1794 = vmatprep.subr.mxu0 0.0
        %1795 = vmatpush1.msra.mxu0 0.0
        %1796 = vmatprep.subr.mxu0 0.0
        %1797 = vmatpush1.msra.mxu0 0.0
        %1798 = vmatprep.subr.mxu0 0.0
        %1799 = vmatpush1.msra.mxu0 0.0
        %1800 = vmatprep.subr.mxu0 0.0
        %1801 = vmatpush1.msra.mxu0 0.0
        %1802 = vmatprep.subr.mxu0 0.0
        %1803 = vmatpush1.msra.mxu0 0.0
        %1804 = vmatprep.subr.mxu0 0.0
        %1805 = vmatpush1.msra.mxu0 0.0
        %1806 = vmatprep.subr.mxu0 0.0
        %1807 = vmatpush1.msra.mxu0 0.0
        %1808 = vmatprep.subr.mxu0 0.0
        %1809 = vmatpush1.msra.mxu0 0.0
        %1810 = vmatprep.subr.mxu0 0.0
        %1811 = vmatpush1.msra.mxu0 0.0
        %1812 = vmatprep.subr.mxu0 0.0
        %1813 = vmatpush1.msra.mxu0 0.0
        %1814 = vmatprep.subr.mxu0 0.0
        %1815 = vmatpush1.msra.mxu0 0.0
        %1816 = vmatprep.subr.mxu0 0.0
        %1817 = vmatpush1.msra.mxu0 0.0
        %1818 = vmatprep.subr.mxu0 0.0
        %1819 = vmatpush1.msra.mxu0 0.0
        %1820 = vmatprep.subr.mxu0 0.0
        %1821 = vmatpush1.msra.mxu0 0.0
        %1822 = vmatprep.subr.mxu0 0.0
        %1823 = vmatpush1.msra.mxu0 0.0
        %1824 = vmatprep.subr.mxu0 0.0
        %1825 = vmatpush1.msra.mxu0 0.0
        %1826 = vmatprep.subr.mxu0 0.0
        %1827 = vmatpush1.msra.mxu0 0.0
        %1828 = vmatprep.subr.mxu0 0.0
        %1829 = vmatpush1.msra.mxu0 0.0
        %1830 = vmatprep.subr.mxu0 0.0
        %1831 = vmatpush1.msra.mxu0 0.0
        %1832 = vmatprep.subr.mxu0 0.0
        %1833 = vmatpush1.msra.mxu0 0.0
        %1834 = vmatprep.subr.mxu0 0.0
        %1835 = vmatpush1.msra.mxu0 0.0
        %1836 = vmatprep.subr.mxu0 0.0
        %1837 = vmatpush1.msra.mxu0 0.0
        %1838 = vmatprep.subr.mxu0 0.0
        %1839 = vmatpush1.msra.mxu0 0.0
        %1840 = vmatprep.subr.mxu0 0.0
        %1841 = vmatpush1.msra.mxu0 0.0
        %1842 = vmatprep.mubr.f32.mxu0 0.0
        %1843 = vmatmul.mubr.f32.gmra.mrb[0].mxu0 %v1755
        %v1844 = vpop.f32.mrb[0].mxu0
        %v1845 = vadd.f32 %v1751, %v1844
        %v1846 = vpop.f32.mrb[0].mxu0
        %1847 = vmatprep.mubr.f32.mxu0 0.0
        %1848 = vmatmul.mubr.f32.gmra.mrb[0].mxu0 %v1758
        %v1849 = vpop.f32.mrb[0].mxu0
        %v1850 = vadd.f32 %v1751, %v1849
        %v1851 = vpop.f32.mrb[0].mxu0
        %1852 = vmatprep.mubr.f32.mxu0 0.0
        %1853 = vmatmul.mubr.f32.gmra.mrb[0].mxu0 %v1761
        %v1854 = vpop.f32.mrb[0].mxu0
        %v1855 = vadd.f32 %v1751, %v1854
        %v1856 = vpop.f32.mrb[0].mxu0
        %1857 = vmatprep.mubr.f32.mxu0 0.0
        %1858 = vmatmul.mubr.f32.gmra.mrb[0].mxu0 %v1764
        %v1859 = vpop.f32.mrb[0].mxu0
        %v1860 = vadd.f32 %v1751, %v1859
        %v1861 = vpop.f32.mrb[0].mxu0
        %1862 = vmatprep.mubr.f32.mxu0 0.0
        %1863 = vmatmul.mubr.f32.gmra.mrb[0].mxu0 %v1767
        %v1864 = vpop.f32.mrb[0].mxu0
        %v1865 = vadd.f32 %v1751, %v1864
        %v1866 = vpop.f32.mrb[0].mxu0
        %1867 = vmatprep.mubr.f32.mxu0 0.0
        %1868 = vmatmul.mubr.f32.gmra.mrb[0].mxu0 %v1770
        %v1869 = vpop.f32.mrb[0].mxu0
        %v1870 = vadd.f32 %v1751, %v1869
        %v1871 = vpop.f32.mrb[0].mxu0
        %1872 = vmatprep.mubr.f32.mxu0 0.0
        %1873 = vmatmul.mubr.f32.gmra.mrb[0].mxu0 %v1773
        %v1874 = vpop.f32.mrb[0].mxu0
        %v1875 = vadd.f32 %v1751, %v1874
        %v1876 = vpop.f32.mrb[0].mxu0
        %1877 = vmatprep.mubr.f32.mxu0 0.0
        %1878 = vmatmul.mubr.f32.gmra.mrb[0].mxu0 %v1776
        %v1879 = vpop.f32.mrb[0].mxu0
        %v1880 = vadd.f32 %v1751, %v1879
        %v1881 = vpop.f32.mrb[0].mxu0
        %1882 = vdwg.mxu0
        %1891 = vrot.lane.b32.xlu0 %v1845, 127
        %v1892 = vpop.permute.xlu0 %1891
        %1893 = vrot.lane.b32.xlu0 %v1850, 127
        %v1894 = vpop.permute.xlu0 %1893
        %1895 = vrot.lane.b32.xlu0 %v1855, 127
        %v1896 = vpop.permute.xlu0 %1895
        %1897 = vrot.lane.b32.xlu0 %v1860, 127
        %v1898 = vpop.permute.xlu0 %1897
        %1899 = vrot.lane.b32.xlu0 %v1865, 127
        %v1900 = vpop.permute.xlu0 %1899
        %1901 = vrot.lane.b32.xlu0 %v1870, 127
        %v1902 = vpop.permute.xlu0 %1901
        %1903 = vrot.lane.b32.xlu0 %v1875, 127
        %v1904 = vpop.permute.xlu0 %1903
        %1905 = vrot.lane.b32.xlu0 %v1880, 127
        %v1906 = vpop.permute.xlu0 %1905
        %v1915 = vmax.f32 %v1845, %v1892
        %v1916 = vmax.f32 %v1850, %v1894
        %v1917 = vmax.f32 %v1855, %v1896
        %v1918 = vmax.f32 %v1860, %v1898
        %v1919 = vmax.f32 %v1865, %v1900
        %v1920 = vmax.f32 %v1870, %v1902
        %v1921 = vmax.f32 %v1875, %v1904
        %v1922 = vmax.f32 %v1880, %v1906
        %v1923 = vsub.f32 %v1845, %v1915
        %v1924 = vsub.f32 %v1850, %v1916
        %v1925 = vsub.f32 %v1855, %v1917
        %v1926 = vsub.f32 %v1860, %v1918
        %v1927 = vsub.f32 %v1865, %v1919
        %v1928 = vsub.f32 %v1870, %v1920
        %v1929 = vsub.f32 %v1875, %v1921
        %v1930 = vsub.f32 %v1880, %v1922
        %v1931 = vmul.f32 %v1923, 1.442695
        %v1932 = vpow.pop %v1931
        %v1933 = vmul.f32 %v1924, 1.442695
        %v1934 = vpow.pop %v1933
        %v1935 = vmul.f32 %v1925, 1.442695
        %v1936 = vpow.pop %v1935
        %v1937 = vmul.f32 %v1926, 1.442695
        %v1938 = vpow.pop %v1937
        %v1939 = vmul.f32 %v1927, 1.442695
        %v1940 = vpow.pop %v1939
        %v1941 = vmul.f32 %v1928, 1.442695
        %v1942 = vpow.pop %v1941
        %v1943 = vmul.f32 %v1929, 1.442695
        %v1944 = vpow.pop %v1943
        %v1945 = vmul.f32 %v1930, 1.442695
        %v1946 = vpow.pop %v1945
        %1955 = vrot.lane.b32.xlu0 %v1915, 1
        %v1956 = vpop.permute.xlu0 %1955
        %1957 = vrot.lane.b32.xlu0 %v1916, 1
        %v1958 = vpop.permute.xlu0 %1957
        %1959 = vrot.lane.b32.xlu0 %v1917, 1
        %v1960 = vpop.permute.xlu0 %1959
        %1961 = vrot.lane.b32.xlu0 %v1918, 1
        %v1962 = vpop.permute.xlu0 %1961
        %1963 = vrot.lane.b32.xlu0 %v1919, 1
        %v1964 = vpop.permute.xlu0 %1963
        %1965 = vrot.lane.b32.xlu0 %v1920, 1
        %v1966 = vpop.permute.xlu0 %1965
        %1967 = vrot.lane.b32.xlu0 %v1921, 1
        %v1968 = vpop.permute.xlu0 %1967
        %1969 = vrot.lane.b32.xlu0 %v1922, 1
        %v1970 = vpop.permute.xlu0 %1969
        %v1979 = vsub.f32 %v1845, %v1956
        %v1980 = vsub.f32 %v1850, %v1958
        %v1981 = vsub.f32 %v1855, %v1960
        %v1982 = vsub.f32 %v1860, %v1962
        %v1983 = vsub.f32 %v1865, %v1964
        %v1984 = vsub.f32 %v1870, %v1966
        %v1985 = vsub.f32 %v1875, %v1968
        %v1986 = vsub.f32 %v1880, %v1970
        %v1987 = vmul.f32 %v1979, 1.442695
        %v1988 = vpow.pop %v1987
        %v1989 = vmul.f32 %v1980, 1.442695
        %v1990 = vpow.pop %v1989
        %v1991 = vmul.f32 %v1981, 1.442695
        %v1992 = vpow.pop %v1991
        %v1993 = vmul.f32 %v1982, 1.442695
        %v1994 = vpow.pop %v1993
        %v1995 = vmul.f32 %v1983, 1.442695
        %v1996 = vpow.pop %v1995
        %v1997 = vmul.f32 %v1984, 1.442695
        %v1998 = vpow.pop %v1997
        %v1999 = vmul.f32 %v1985, 1.442695
        %v2000 = vpow.pop %v1999
        %v2001 = vmul.f32 %v1986, 1.442695
        %v2002 = vpow.pop %v2001
        %2011 = vrot.lane.b32.xlu0 %v1988, 127
        %v2012 = vpop.permute.xlu0 %2011
        %2013 = vrot.lane.b32.xlu0 %v1990, 127
        %v2014 = vpop.permute.xlu0 %2013
        %2015 = vrot.lane.b32.xlu0 %v1992, 127
        %v2016 = vpop.permute.xlu0 %2015
        %2017 = vrot.lane.b32.xlu0 %v1994, 127
        %v2018 = vpop.permute.xlu0 %2017
        %2019 = vrot.lane.b32.xlu0 %v1996, 127
        %v2020 = vpop.permute.xlu0 %2019
        %2021 = vrot.lane.b32.xlu0 %v1998, 127
        %v2022 = vpop.permute.xlu0 %2021
        %2023 = vrot.lane.b32.xlu0 %v2000, 127
        %v2024 = vpop.permute.xlu0 %2023
        %2025 = vrot.lane.b32.xlu0 %v2002, 127
        %v2026 = vpop.permute.xlu0 %2025
        %v2035 = vadd.f32 %v1932, %v2012
        %v2036 = vadd.f32 %v1934, %v2014
        %v2037 = vadd.f32 %v1936, %v2016
        %v2038 = vadd.f32 %v1938, %v2018
        %v2039 = vadd.f32 %v1940, %v2020
        %v2040 = vadd.f32 %v1942, %v2022
        %v2041 = vadd.f32 %v1944, %v2024
        %v2042 = vadd.f32 %v1946, %v2026
        %v2043 = vlog2.pop %v2035
        %v2044 = vmul.f32 %v2043, 0.6931472
        %v2045 = vlog2.pop %v2036
        %v2046 = vmul.f32 %v2045, 0.6931472
        %v2047 = vlog2.pop %v2037
        %v2048 = vmul.f32 %v2047, 0.6931472
        %v2049 = vlog2.pop %v2038
        %v2050 = vmul.f32 %v2049, 0.6931472
        %v2051 = vlog2.pop %v2039
        %v2052 = vmul.f32 %v2051, 0.6931472
        %v2053 = vlog2.pop %v2040
        %v2054 = vmul.f32 %v2053, 0.6931472
        %v2055 = vlog2.pop %v2041
        %v2056 = vmul.f32 %v2055, 0.6931472
        %v2057 = vlog2.pop %v2042
        %v2058 = vmul.f32 %v2057, 0.6931472
        %v2059 = vadd.f32 %v1915, %v2044
        %v2060 = vadd.f32 %v1916, %v2046
        %v2061 = vadd.f32 %v1917, %v2048
        %v2062 = vadd.f32 %v1918, %v2050
        %v2063 = vadd.f32 %v1919, %v2052
        %v2064 = vadd.f32 %v1920, %v2054
        %v2065 = vadd.f32 %v1921, %v2056
        %v2066 = vadd.f32 %v1922, %v2058
        %2068 = vset.pattern.permute.xlu0 0
        %2069 = vperm.xlu0 %2068, %v2059
        %v2070 = vpop.permute.xlu0 %2069
        %2073 = vset.pattern.permute.xlu0 0
        %2074 = vperm.xlu0 %2073, %v2060
        %v2075 = vpop.permute.xlu0 %2074
        %2078 = vset.pattern.permute.xlu0 0
        %2079 = vperm.xlu0 %2078, %v2061
        %v2080 = vpop.permute.xlu0 %2079
        %2083 = vset.pattern.permute.xlu0 0
        %2084 = vperm.xlu0 %2083, %v2062
        %v2085 = vpop.permute.xlu0 %2084
        %2088 = vset.pattern.permute.xlu0 0
        %2089 = vperm.xlu0 %2088, %v2063
        %v2090 = vpop.permute.xlu0 %2089
        %2093 = vset.pattern.permute.xlu0 0
        %2094 = vperm.xlu0 %2093, %v2064
        %v2095 = vpop.permute.xlu0 %2094
        %2098 = vset.pattern.permute.xlu0 0
        %2099 = vperm.xlu0 %2098, %v2065
        %v2100 = vpop.permute.xlu0 %2099
        %2103 = vset.pattern.permute.xlu0 0
        %2104 = vperm.xlu0 %2103, %v2066
        %v2105 = vpop.permute.xlu0 %2104
        %v2107 = vsub.f32 %v1845, %v2070
        %v2108 = vsub.f32 %v1850, %v2075
        %v2109 = vsub.f32 %v1855, %v2080
        %v2110 = vsub.f32 %v1860, %v2085
        %v2111 = vsub.f32 %v1865, %v2090
        %v2112 = vsub.f32 %v1870, %v2095
        %v2113 = vsub.f32 %v1875, %v2100
        %v2114 = vsub.f32 %v1880, %v2105
        %vm2115 = vcmask 15360
        %2116 = vst.msk [vmem:[%s557] sm:$0xff] %vm2115, %v2107
        %2117 = vst.msk [vmem:[%s557 + $0x8] sm:$0xff] %vm2115, %v2108
        %2118 = vst.msk [vmem:[%s557 + $0x10] sm:$0xff] %vm2115, %v2109
        %2119 = vst.msk [vmem:[%s557 + $0x18] sm:$0xff] %vm2115, %v2110
        %2120 = vst.msk [vmem:[%s557 + $0x20] sm:$0xff] %vm2115, %v2111
        %2121 = vst.msk [vmem:[%s557 + $0x28] sm:$0xff] %vm2115, %v2112
        %2122 = vst.msk [vmem:[%s557 + $0x30] sm:$0xff] %vm2115, %v2113
        %2123 = vst.msk [vmem:[%s557 + $0x38] sm:$0xff] %vm2115, %v2114
        %s2124 = smul.u32 4, %s32
        %p2125 = scmp.lt.s32.totalorder %s2124, 7
        %s2126 = scalar_select %p2125, %s2124, 7
        %s2127 = smul.addr %s2126, 2
        %s2128 = smul.addr %s2127, 8
        %s2129 = scalar_lea.vmem %s13, %s2128
        // Predicated region
        $region97: #{tpu_custom_call.1} parent=71 // pred_check
          %p2130 = pneg %p333
        $region98: #{tpu_custom_call.1} parent=71 // pred_check_branch
          %2132 = sbr.rel (%p2130) target = $region100
        $region99: #{tpu_custom_call.1} parent=71 // pred_region
          %s2133 = smul.u32 4, %s32
        $region100: #{tpu_custom_call.1} parent=71 // pred_fallthru
          _
      $region72: #{tpu_custom_call.1} parent=5 // pred_fallthru
        _
      %p2134 = scmp.le.s32.totalorder 2, %s27
      // Predicated region
      $region101: #{tpu_custom_call.1} parent=5 // pred_check
        %p2135 = pneg %p2134
      $region102: #{tpu_custom_call.1} parent=5 // pred_check_branch
        %2137 = sbr.rel (%p2135) target = $region104
      $region103: #{tpu_custom_call.1} parent=5 // pred_region
        %s2138 = ssub.s32 %s27, 2
        // Predicated region
        $region105: #{tpu_custom_call.1} parent=103 // pred_check
          %p2139 = pneg %p339
        $region106: #{tpu_custom_call.1} parent=103 // pred_check_branch
          %2141 = sbr.rel (%p2139) target = $region108
        $region107: #{tpu_custom_call.1} parent=103 // pred_region
          %s2142 = smul.u32 4, %s33
          %p2143 = scmp.lt.s32.totalorder %s2142, 7
          %s2144 = scalar_select %p2143, %s2142, 7
          %s2145 = smul.addr %s2144, 2
          %s2146 = smul.addr %s2145, 8
          %s2147 = scalar_lea.vmem %s13, %s2146
        $region108: #{tpu_custom_call.1} parent=103 // pred_fallthru
          _
      $region104: #{tpu_custom_call.1} parent=5 // pred_fallthru
        _
    $region6: #{tpu_custom_call.1} parent=1 // loop_footer
      %s31 = sadd.s32 1, %s27
    $region7: #{tpu_custom_call.1} parent=1 // loop_footer_branch
      %26 = sbr.rel target = $region3
    $region8: #{tpu_custom_call.1} parent=1 // loop_exit
      _
    %2148 = vsyncpa [#allocation3], 1
    %s2149 = scalar_lea.sflag [#allocation3], 1
    %2150 = vsyncpa %s2149, 1
    %2151 = vsyncpa [#allocation5], 1
    %s2152 = scalar_lea.sflag [#allocation5], 1
    %2153 = vsyncpa %s2152, 1
    %2154 = vsyncpa [#allocation8], 1
    %2155 = vsyncpa [#allocation11], 1

</llo_original>
